<compile_context>
chip_gen: v6e
topology: v6e:2x2x1
jax: 0.10.0
libtpu: 0.0.40
codegen_flags: <defaults>
</compile_context>

<pallas_src>
import functools

import numpy as np
import jax
import jax.numpy as jnp
from jax.experimental import pallas as pl
from jax.experimental.pallas import tpu as pltpu


def _round_up(x, m):
    return (x + m - 1) // m * m


# ----------------------------------------------------------------------------
# Pallas kernels
# ----------------------------------------------------------------------------
def _matmul_affine_kernel(a_ref, b_ref, s_ref, t_ref, o_ref, acc_ref, *, relu):
    """bf16 x bf16 -> f32 accumulate, fused per-column scale/shift (+ReLU)."""
    @pl.when(pl.program_id(2) == 0)
    def _():
        acc_ref[...] = jnp.zeros_like(acc_ref)

    acc_ref[...] += jnp.dot(a_ref[...], b_ref[...],
                            preferred_element_type=jnp.float32)

    @pl.when(pl.program_id(2) == pl.num_programs(2) - 1)
    def _():
        y = acc_ref[...] * s_ref[...] + t_ref[...]
        if relu:
            y = jnp.maximum(y, 0.0)
        o_ref[...] = y


@functools.partial(jax.jit, static_argnames=("relu",))
def _pallas_matmul_affine(a, b, scale, shift, *, relu):
    """relu?((a @ b) * scale + shift); bf16 MXU inputs, f32 accumulate."""
    M, K = a.shape
    N = b.shape[1]

    Mp = _round_up(M, 8)
    if Mp <= 512:
        TM = Mp
    elif Mp % 256 == 0:
        TM = 256
    else:
        TM, Mp = 256, _round_up(M, 256)

    Np = _round_up(N, 128)
    if Np <= 512:
        TN = Np
    elif Np % 256 == 0:
        TN = 256
    else:
        TN, Np = 256, _round_up(N, 256)

    Kp = _round_up(K, 128)
    if Kp <= 1536:
        TK = Kp
    elif Kp % 512 == 0:
        TK = 512
    elif Kp % 256 == 0:
        TK = 256
    else:
        TK, Kp = 512, _round_up(K, 512)

    a = a.astype(jnp.bfloat16)
    b = b.astype(jnp.bfloat16)
    if (Mp, Kp) != (M, K):
        a = jnp.pad(a, ((0, Mp - M), (0, Kp - K)))
    if (Kp, Np) != (K, N):
        b = jnp.pad(b, ((0, Kp - K), (0, Np - N)))
    s2 = jnp.pad(scale.astype(jnp.float32), (0, Np - N)).reshape(1, Np)
    t2 = jnp.pad(shift.astype(jnp.float32), (0, Np - N)).reshape(1, Np)

    out = pl.pallas_call(
        functools.partial(_matmul_affine_kernel, relu=relu),
        out_shape=jax.ShapeDtypeStruct((Mp, Np), jnp.float32),
        grid_spec=pltpu.PrefetchScalarGridSpec(
            num_scalar_prefetch=0,
            grid=(Mp // TM, Np // TN, Kp // TK),
            in_specs=[pl.BlockSpec((TM, TK), lambda i, j, k: (i, k)),
                      pl.BlockSpec((TK, TN), lambda i, j, k: (k, j)),
                      pl.BlockSpec((1, TN), lambda i, j, k: (0, j)),
                      pl.BlockSpec((1, TN), lambda i, j, k: (0, j))],
            out_specs=pl.BlockSpec((TM, TN), lambda i, j, k: (i, j)),
            scratch_shapes=[pltpu.VMEM((TM, TN), jnp.float32)]),
        compiler_params=pltpu.CompilerParams(
            dimension_semantics=("parallel", "parallel", "arbitrary")),
    )(a, b, s2, t2)
    if (Mp, Np) != (M, N):
        out = out[:M, :N]
    return out


def matmul_affine(a, b, scale=None, shift=None, relu=False):
    """y = relu?(a @ b * scale + shift).  Tiny shapes fall back to plain XLA."""
    M, _ = a.shape
    N = b.shape[1]
    if scale is None:
        scale = jnp.ones((N,), jnp.float32)
    if shift is None:
        shift = jnp.zeros((N,), jnp.float32)
    if M < 64 or N < 128:     # padding a 128-wide MXU tile would be >50% waste
        y = jnp.dot(a, b, preferred_element_type=jnp.float32)
        y = y * scale[None, :] + shift[None, :]
        return jnp.maximum(y, 0.0) if relu else y
    return _pallas_matmul_affine(a, b, scale, shift, relu=relu)


def _scale_shift_kernel(x_ref, s_ref, t_ref, o_ref, *, relu):
    y = x_ref[...] * s_ref[...] + t_ref[...]
    if relu:
        y = jnp.maximum(y, 0.0)
    o_ref[...] = y


@functools.partial(jax.jit, static_argnames=("relu",))
def pallas_scale_shift(x, scale, shift, *, relu=False):
    """Per-channel affine (+ optional ReLU) on a (rows, C) slab."""
    M, C = x.shape
    return pl.pallas_call(
        functools.partial(_scale_shift_kernel, relu=relu),
        out_shape=jax.ShapeDtypeStruct((M, C), jnp.float32),
    )(x, scale.reshape(1, C), shift.reshape(1, C))


def _layernorm_kernel(x_ref, w_ref, b_ref, o_ref, *, eps):
    x = x_ref[...]
    mu = jnp.mean(x, axis=-1, keepdims=True)
    xc = x - mu
    var = jnp.mean(xc * xc, axis=-1, keepdims=True)
    o_ref[...] = xc * jax.lax.rsqrt(var + eps) * w_ref[...] + b_ref[...]


@functools.partial(jax.jit, static_argnames=("eps",))
def pallas_layernorm(x, w, b, *, eps=1e-6):
    M, C = x.shape
    return pl.pallas_call(
        functools.partial(_layernorm_kernel, eps=eps),
        out_shape=jax.ShapeDtypeStruct((M, C), jnp.float32),
    )(x, w.reshape(1, C), b.reshape(1, C))


def _mha_kernel(q_ref, k_ref, v_ref, o_ref, *, scale):
    q = q_ref[0]                                        # (H, N, Dh) bf16
    k = k_ref[0]
    v = v_ref[0]
    s = jax.lax.dot_general(q, k, (((2,), (2,)), ((0,), (0,))),
                            preferred_element_type=jnp.float32) * scale
    s = s - jnp.max(s, axis=-1, keepdims=True)
    p = jnp.exp(s)
    p = p * pl.reciprocal(jnp.sum(p, axis=-1, keepdims=True), approx=True)
    o_ref[0] = jax.lax.dot_general(p.astype(v.dtype), v,
                                   (((2,), (1,)), ((0,), (0,))),
                                   preferred_element_type=jnp.float32)


@functools.partial(jax.jit, static_argnames=("scale",))
def _pallas_mha(q, k, v, *, scale):
    """q,k,v: (B, H, N, Dh).  All heads of one batch element per grid step."""
    B, H, N, D = q.shape
    q = q.astype(jnp.bfloat16)
    k = k.astype(jnp.bfloat16)
    v = v.astype(jnp.bfloat16)
    return pl.pallas_call(
        functools.partial(_mha_kernel, scale=scale),
        out_shape=jax.ShapeDtypeStruct((B, H, N, D), jnp.float32),
        grid_spec=pltpu.PrefetchScalarGridSpec(
            num_scalar_prefetch=0,
            grid=(B,),
            in_specs=[pl.BlockSpec((1, H, N, D), lambda i: (i, 0, 0, 0))] * 3,
            out_specs=pl.BlockSpec((1, H, N, D), lambda i: (i, 0, 0, 0))),
        compiler_params=pltpu.CompilerParams(
            dimension_semantics=("parallel",),
            vmem_limit_bytes=48 * 1024 * 1024),
    )(q, k, v)


def multihead_attention(q, k, v, *, scale):
    if q.shape[-1] < 32:
        # TODO(synk): FA1 (head_dim=14) is MXU-starved; keep it in plain XLA.
        s = jnp.einsum("bhqd,bhkd->bhqk", q, k) * scale
        p = jax.nn.softmax(s, axis=-1)
        return jnp.einsum("bhqk,bhkd->bhqd", p, v)
    return _pallas_mha(q, k, v, scale=scale)


# ----------------------------------------------------------------------------
# NN building blocks (glue around the Pallas kernels) — NHWC everywhere
# ----------------------------------------------------------------------------
def _affine_from(bias, bn, cout, eps=1e-5):
    """Fold (optional) bias and (optional) inference BN into scale/shift."""
    if bn is not None:
        s = bn["g"] * jax.lax.rsqrt(bn["v"] + eps)
        t = bn["b"] - bn["m"] * s
        if bias is not None:
            t = t + bias * s
        return s, t
    s = jnp.ones((cout,), jnp.float32)
    t = bias if bias is not None else jnp.zeros((cout,), jnp.float32)
    return s, t


def linear(x, p, *, bn=None, relu=False):
    scale, shift = _affine_from(p.get("b"), bn, p["w"].shape[1])
    return matmul_affine(x, p["w"], scale, shift, relu=relu)


def conv2d(x, p, stride=1, padding=0, bn=None, relu=False):
    """x NHWC; p['w'] (Cout, Cin, kh, kw) torch layout.  im2col + fused matmul."""
    B, H, W, Cin = x.shape
    Cout, _, kh, kw = p["w"].shape
    xp = jnp.pad(x, ((0, 0), (padding, padding), (padding, padding), (0, 0))) \
        if padding else x
    Ho = (H + 2 * padding - kh) // stride + 1
    Wo = (W + 2 * padding - kw) // stride + 1
    # TODO(synk): fold im2col into the matmul via a kh*kw grid axis / window
    #             index_map to avoid materializing the expanded patches in HBM.
    cols = [xp[:, i:i + stride * Ho:stride, j:j + stride * Wo:stride, :]
            for i in range(kh) for j in range(kw)]
    patches = jnp.concatenate(cols, axis=-1).reshape(B * Ho * Wo, kh * kw * Cin)
    wmat = jnp.transpose(p["w"], (2, 3, 1, 0)).reshape(kh * kw * Cin, Cout)
    scale, shift = _affine_from(p.get("b"), bn, Cout)
    y = matmul_affine(patches, wmat, scale, shift, relu=relu)
    return y.reshape(B, Ho, Wo, Cout)


def stage_bn_relu(x, bn, eps=1e-5):
    """Standalone inference BatchNorm2d + ReLU on an NHWC tensor."""
    B, H, W, C = x.shape
    s = bn["g"] * jax.lax.rsqrt(bn["v"] + eps)
    t = bn["b"] - bn["m"] * s
    y = pallas_scale_shift(x.reshape(B * H * W, C), s, t, relu=True)
    return y.reshape(B, H, W, C)


def _adaptive_matrix(in_size, out_size):
    P = np.zeros((out_size, in_size), np.float32)
    for i in range(out_size):
        s = (i * in_size) // out_size
        e = ((i + 1) * in_size + out_size - 1) // out_size
        P[i, s:e] = 1.0 / (e - s)
    return jnp.asarray(P)


def adaptive_avg_pool2d(x, out_hw):
    _, H, W, _ = x.shape
    Ph = _adaptive_matrix(H, out_hw[0])
    Pw = _adaptive_matrix(W, out_hw[1])
    return jnp.einsum("oh,bhwc,pw->bopc", Ph, x, Pw)


def maxpool2d(x, k=3, stride=2, padding=1):
    return jax.lax.reduce_window(
        x, -jnp.inf, jax.lax.max,
        window_dimensions=(1, k, k, 1),
        window_strides=(1, stride, stride, 1),
        padding=((0, 0), (padding, padding), (padding, padding), (0, 0)))


def upsample_nearest(x, out_hw):
    _, H, W, _ = x.shape
    hi = (np.arange(out_hw[0]) * H) // out_hw[0]
    wi = (np.arange(out_hw[1]) * W) // out_hw[1]
    return x[:, hi][:, :, wi]


# ----------------------------------------------------------------------------
# ResNet-18 backbone (random init — no checkpoint), BN/ReLU fused into convs
# ----------------------------------------------------------------------------
def basic_block(x, p):
    out = conv2d(x, p["conv1"], stride=p["stride"], padding=1,
                 bn=p["bn1"], relu=True)
    out = conv2d(out, p["conv2"], stride=1, padding=1,
                 bn=p["bn2"], relu=False)
    if "down" in p:
        identity = conv2d(x, p["down"], stride=p["stride"], padding=0,
                          bn=p["down_bn"], relu=False)
    else:
        identity = x
    return jnp.maximum(out + identity, 0.0)


def resnet_stage(x, blocks):
    for b in blocks:
        x = basic_block(x, b)
    return x


# ----------------------------------------------------------------------------
# Transformer pieces (SAttention / Block)
# ----------------------------------------------------------------------------
def mha(x, p, num_heads, head_mask, scale):
    B, N, C = x.shape
    Dh = C // num_heads
    qkv = linear(x.reshape(B * N, C), p["qkv"]).reshape(B, N, 3, num_heads, Dh)
    qkv = qkv.transpose(2, 0, 3, 1, 4)          # (3, B, H, N, Dh)
    q, k, v = qkv[0], qkv[1], qkv[2]
    # head-drop: attn*mask before softmax == softmax(((q*mask) @ k^T) * scale)
    q = q * head_mask[None, :, None, None]
    o = multihead_attention(q, k, v, scale=scale)
    o = o.transpose(0, 2, 1, 3).reshape(B * N, C)
    return linear(o, p["proj"]).reshape(B, N, C)


def transformer_block(x, p, num_heads, head_mask):
    B, N, C = x.shape
    scale = float((C // num_heads) ** (-0.5))
    h = pallas_layernorm(x.reshape(B * N, C), p["ln1_w"], p["ln1_b"], eps=1e-6)
    x = x + mha(h.reshape(B, N, C), p, num_heads, head_mask, scale)
    h = pallas_layernorm(x.reshape(B * N, C), p["ln2_w"], p["ln2_b"], eps=1e-6)
    h = linear(h, p["fc1"])
    # TODO(synk): exact erf-GELU stays in XLA glue (no clean Mosaic erf lowering).
    h = jax.nn.gelu(h, approximate=False)
    h = linear(h, p["fc2"]).reshape(B, N, C)
    return x + h


# ----------------------------------------------------------------------------
# Attention module (the `Attention` class) — NHWC
# ----------------------------------------------------------------------------
def attention_module(x, p):
    B = x.shape[0]
    x = adaptive_avg_pool2d(x, (7, 7))                        # (B, 7, 7, Cin)
    # the four 3x3 branch convs share their input: run them as ONE matmul
    w_cat = jnp.concatenate([p["conv"][i]["w"] for i in range(4)], axis=0)
    b_cat = jnp.concatenate([p["conv"][i]["b"] for i in range(4)], axis=0)
    fm_all = conv2d(x, {"w": w_cat, "b": b_cat}, stride=1, padding=1)   # (B,7,7,3072)
    gap_all = jnp.mean(fm_all, axis=(1, 2))                   # (B, 3072)
    branch, weights = [], []
    for i in range(4):
        fm = fm_all[..., i * 768:(i + 1) * 768]               # (B, 7, 7, 768)
        gap = gap_all[:, i * 768:(i + 1) * 768]               # (B, 768)
        # channel attention (M = batch -> tiny, XLA path inside matmul_affine)
        h = linear(gap, p["channel"][i][0], relu=True)
        ch = jax.nn.sigmoid(linear(h, p["channel"][i][1]))    # (B, 768)
        # spatial attention: 1x1 convs as per-pixel matmuls, BN+ReLU fused
        sp_in = fm.reshape(B * 49, 768)
        h = linear(sp_in, p["spatial"][i][0], bn=p["spatial_bn"][i], relu=True)
        sp = jax.nn.sigmoid(linear(h, p["spatial"][i][1]))
        sp = sp.reshape(B, 7, 7, 1)
        # scalar weight branch (tiny)
        h = jnp.tanh(linear(gap, p["weight"][i][0], bn=p["weight_bn"][i]))
        weights.append(linear(h, p["weight"][i][1]))          # (B, 1)
        branch.append((fm, ch, sp))
    wv = jax.nn.softmax(jnp.concatenate(weights, axis=1), axis=1)   # (B, 4)
    fmaps = [fm * (ch[:, None, None, :] + sp) * wv[:, i][:, None, None, None]
             for i, (fm, ch, sp) in enumerate(branch)]
    temp1 = jnp.concatenate((fmaps[0], fmaps[1]), axis=1)     # (B, 14, 7, 768)
    temp2 = jnp.concatenate((fmaps[2], fmaps[3]), axis=1)
    feature_map = jnp.concatenate((temp1, temp2), axis=2)     # (B, 14, 14, 768)
    a1 = feature_map.reshape(B, 196, 768)                     # tokens = spatial
    a1 = transformer_block(a1, p["SA1"], 12, p["SA1_mask"])
    a1 = a1.reshape(B, 14, 14, 768)
    a2 = feature_map.reshape(B, 196, 768).transpose(0, 2, 1)  # tokens = channels
    a2 = transformer_block(a2, p["FA1"], 14, p["FA1_mask"])
    a2 = a2.transpose(0, 2, 1).reshape(B, 14, 14, 768)
    return (a1 + a2) / 2.0


def select_branch(x, pair):
    h = linear(x, pair[0], relu=True)
    return jax.nn.sigmoid(linear(h, pair[1]))


# ----------------------------------------------------------------------------
# SANN_select forward
# ----------------------------------------------------------------------------
def sann_select_forward(params, x):
    x = jnp.transpose(x, (0, 2, 3, 1))          # NCHW -> NHWC (channel-last)

    # ResNet stem
    x = conv2d(x, params["stem_conv"], stride=2, padding=3,
               bn=params["stem_bn"], relu=True)
    x = maxpool2d(x, 3, 2, 1)

    x = resnet_stage(x, params["layer1"])
    fm1 = attention_module(adaptive_avg_pool2d(x, (14, 14)), params["att1"])
    fm1 = stage_bn_relu(fm1, params["bn"])
    imp1 = select_branch(jnp.mean(fm1, axis=(1, 2)), params["select"][0])

    x = resnet_stage(x, params["layer2"])
    fm2 = attention_module(adaptive_avg_pool2d(x, (14, 14)), params["att2"])
    fm2 = stage_bn_relu(fm2, params["bn"])
    imp2 = select_branch(jnp.mean(fm2, axis=(1, 2)), params["select"][1])

    x = resnet_stage(x, params["layer3"])
    fm3 = attention_module(adaptive_avg_pool2d(x, (14, 14)), params["att3"])
    fm3 = stage_bn_relu(fm3, params["bn"])
    imp3 = select_branch(jnp.mean(fm3, axis=(1, 2)), params["select"][2])

    x = resnet_stage(x, params["layer4"])
    fm4 = attention_module(upsample_nearest(x, (14, 14)), params["att4"])
    fm4 = stage_bn_relu(fm4, params["bn"])
    imp4 = select_branch(jnp.mean(fm4, axis=(1, 2)), params["select"][3])

    imp = jax.nn.softmax(jnp.stack([imp1, imp2, imp3, imp4], axis=2), axis=2)
    fm1 = fm1 * imp[:, :, 0][:, None, None, :]
    fm2 = fm2 * imp[:, :, 1][:, None, None, :]
    fm3 = fm3 * imp[:, :, 2][:, None, None, :]
    fm4 = fm4 * imp[:, :, 3][:, None, None, :]
    feature_map = fm1 + fm2 + fm3 + fm4                       # NHWC (B,14,14,768)
    feature = jnp.mean(feature_map, axis=(1, 2))
    out = linear(feature, params["fc"])
    return jnp.transpose(feature_map, (0, 3, 1, 2)), out      # NCHW at boundary


# ----------------------------------------------------------------------------
# Deterministic parameter construction
# ----------------------------------------------------------------------------
class _KeyIter:
    def __init__(self, key):
        self._key = key

    def next(self):
        self._key, sub = jax.random.split(self._key)
        return sub


def dense_params(kg, fin, fout, bias=True):
    w = jax.random.normal(kg.next(), (fin, fout), jnp.float32) / np.sqrt(fin)
    return {"w": w, "b": jnp.zeros((fout,), jnp.float32) if bias else None}


def conv_params(kg, cin, cout, k, bias=True):
    w = jax.random.normal(kg.next(), (cout, cin, k, k), jnp.float32) / np.sqrt(cin * k * k)
    return {"w": w, "b": jnp.zeros((cout,), jnp.float32) if bias else None}


def bn_params(c):
    return {"g": jnp.ones((c,), jnp.float32), "b": jnp.zeros((c,), jnp.float32),
            "m": jnp.zeros((c,), jnp.float32), "v": jnp.ones((c,), jnp.float32)}


def block_params(kg, dim, mlp_ratio=4.0):
    hidden = int(dim * mlp_ratio)
    return {"ln1_w": jnp.ones((dim,), jnp.float32), "ln1_b": jnp.zeros((dim,), jnp.float32),
            "qkv": dense_params(kg, dim, dim * 3, bias=True),
            "proj": dense_params(kg, dim, dim, bias=True),
            "ln2_w": jnp.ones((dim,), jnp.float32), "ln2_b": jnp.zeros((dim,), jnp.float32),
            "fc1": dense_params(kg, dim, hidden, bias=True),
            "fc2": dense_params(kg, hidden, dim, bias=True)}


def attention_params(kg, in_feature, ratio, head_drop_ratio):
    r = 768 // ratio
    return {
        "conv": [conv_params(kg, in_feature, 768, 3, bias=True) for _ in range(4)],
        "channel": [(dense_params(kg, 768, r), dense_params(kg, r, 768)) for _ in range(4)],
        "spatial": [(dense_params(kg, 768, r), dense_params(kg, r, 1)) for _ in range(4)],
        "spatial_bn": [bn_params(r), None, bn_params(r), None],
        "weight": [(dense_params(kg, 768, r), dense_params(kg, r, 1)) for _ in range(4)],
        "weight_bn": [bn_params(r) for _ in range(4)],
        "SA1": block_params(kg, 768),
        "FA1": block_params(kg, 196),
        "SA1_mask": jax.random.bernoulli(kg.next(), head_drop_ratio, (12,)).astype(jnp.float32),
        "FA1_mask": jax.random.bernoulli(kg.next(), head_drop_ratio, (14,)).astype(jnp.float32),
    }


def resnet18_params(kg):
    def block(cin, cout, stride):
        d = {"conv1": conv_params(kg, cin, cout, 3, bias=False), "bn1": bn_params(cout),
             "conv2": conv_params(kg, cout, cout, 3, bias=False), "bn2": bn_params(cout),
             "stride": stride}
        if stride != 1 or cin != cout:
            d["down"] = conv_params(kg, cin, cout, 1, bias=False)
            d["down_bn"] = bn_params(cout)
        return d
    return {
        "stem_conv": conv_params(kg, 3, 64, 7, bias=False),
        "stem_bn": bn_params(64),
        "layer1": [block(64, 64, 1), block(64, 64, 1)],
        "layer2": [block(64, 128, 2), block(128, 128, 1)],
        "layer3": [block(128, 256, 2), block(256, 256, 1)],
        "layer4": [block(256, 512, 2), block(512, 512, 1)],
    }


def sann_select_params(key, num_classes=7):
    kg = _KeyIter(key)
    p = resnet18_params(kg)
    p["att1"] = attention_params(kg, 64, 4, 0.7)
    p["att2"] = attention_params(kg, 128, 4, 0.8)
    p["att3"] = attention_params(kg, 256, 4, 0.9)
    p["att4"] = attention_params(kg, 512, 4, 1.0)
    p["select"] = [(dense_params(kg, 768, 192), dense_params(kg, 192, 768))
                   for _ in range(4)]
    p["fc"] = dense_params(kg, 768, num_classes)
    p["bn"] = bn_params(768)
    return p


# ----------------------------------------------------------------------------
if __name__ == "__main__":
    key = jax.random.PRNGKey(0)
    pkey, xkey = jax.random.split(key)
    params = sann_select_params(pkey)
    x = jax.random.normal(xkey, (2, 3, 64, 64), jnp.float32)   # NCHW image batch
    feature_map, out = sann_select_forward(params, x)
    jax.block_until_ready((feature_map, out))
    assert feature_map.shape == (2, 768, 14, 14), feature_map.shape
    assert out.shape == (2, 7), out.shape
    assert bool(jnp.all(jnp.isfinite(out))) and bool(jnp.all(jnp.isfinite(feature_map)))
    print("KERNEL_OK")
</pallas_src>

<mosaic_0001>
module attributes {stable_mosaic.version = 11 : i64} {
  func.func @_matmul_affine_kernel(%arg0: i32, %arg1: i32, %arg2: i32, %arg3: memref<104x640xbf16, #tpu.memory_space<vmem>>, %arg4: memref<640x256xbf16, #tpu.memory_space<vmem>>, %arg5: memref<1x256xf32, #tpu.memory_space<vmem>>, %arg6: memref<1x256xf32, #tpu.memory_space<vmem>>, %arg7: memref<104x256xf32, #tpu.memory_space<vmem>>, %arg8: memref<104x256xf32, #tpu.memory_space<vmem>>) attributes {dimension_semantics = [#tpu.dimension_semantics<parallel>, #tpu.dimension_semantics<parallel>, #tpu.dimension_semantics<arbitrary>], iteration_bounds = array<i64: 1, 12, 1>, scalar_prefetch = 0 : i64, scratch_operands = 1 : i64, tpu.core_type = #tpu.core_type<tc>, window_params = [{transform_indices = @transform_0, window_bounds = array<i64: 104, 640>}, {transform_indices = @transform_1, window_bounds = array<i64: 640, 256>}, {transform_indices = @transform_2, window_bounds = array<i64: 1, 256>}, {transform_indices = @transform_3, window_bounds = array<i64: 1, 256>}, {transform_indices = @transform_4, window_bounds = array<i64: 104, 256>}]} {
    %c0_i32 = arith.constant 0 : i32
    %0 = arith.cmpi eq, %arg2, %c0_i32 : i32
    %1 = arith.extui %0 : i1 to i32
    %c0_i32_0 = arith.constant 0 : i32
    %2 = arith.cmpi ne, %1, %c0_i32_0 : i32
    scf.if %2 {
      %cst_10 = arith.constant 0.000000e+00 : f32
      %12 = vector.broadcast %cst_10 : f32 to vector<104x256xf32>
      %c0_11 = arith.constant 0 : index
      %c0_12 = arith.constant 0 : index
      %13 = vector.load %arg8[%c0_11, %c0_12] : memref<104x256xf32, #tpu.memory_space<vmem>>, vector<104x256xf32>
      tpu.vector_store %arg8[%c0_11, %c0_12], %12 {strides = array<i32>} : memref<104x256xf32, #tpu.memory_space<vmem>>, vector<104x256xf32>,
    } else {
    }
    %c0 = arith.constant 0 : index
    %c0_1 = arith.constant 0 : index
    %3 = vector.load %arg8[%c0, %c0_1] : memref<104x256xf32, #tpu.memory_space<vmem>>, vector<104x256xf32>
    %c0_2 = arith.constant 0 : index
    %c0_3 = arith.constant 0 : index
    %4 = vector.load %arg3[%c0_2, %c0_3] : memref<104x640xbf16, #tpu.memory_space<vmem>>, vector<104x640xbf16>
    %c0_4 = arith.constant 0 : index
    %c0_5 = arith.constant 0 : index
    %5 = vector.load %arg4[%c0_4, %c0_5] : memref<640x256xbf16, #tpu.memory_space<vmem>>, vector<640x256xbf16>
    %cst = arith.constant dense<0.000000e+00> : vector<104x256xf32>
    %6 = tpu.matmul %4, %5, %cst {dimension_numbers = #tpu.dot_dimension_numbers<[1], [0], [0], [1], [0, 0, 1, 1], [], []>} : vector<104x640xbf16>, vector<640x256xbf16>, vector<104x256xf32> -> vector<104x256xf32>
    %7 = arith.addf %3, %6 : vector<104x256xf32>
    %c0_6 = arith.constant 0 : index
    %c0_7 = arith.constant 0 : index
    %8 = vector.load %arg8[%c0_6, %c0_7] : memref<104x256xf32, #tpu.memory_space<vmem>>, vector<104x256xf32>
    tpu.vector_store %arg8[%c0_6, %c0_7], %7 {strides = array<i32>} : memref<104x256xf32, #tpu.memory_space<vmem>>, vector<104x256xf32>,
    %c0_i32_8 = arith.constant 0 : i32
    %9 = arith.cmpi eq, %arg2, %c0_i32_8 : i32
    %10 = arith.extui %9 : i1 to i32
    %c0_i32_9 = arith.constant 0 : i32
    %11 = arith.cmpi ne, %10, %c0_i32_9 : i32
    scf.if %11 {
      %c0_10 = arith.constant 0 : index
      %c0_11 = arith.constant 0 : index
      %12 = vector.load %arg8[%c0_10, %c0_11] : memref<104x256xf32, #tpu.memory_space<vmem>>, vector<104x256xf32>
      %c0_12 = arith.constant 0 : index
      %c0_13 = arith.constant 0 : index
      %13 = vector.load %arg5[%c0_12, %c0_13] : memref<1x256xf32, #tpu.memory_space<vmem>>, vector<1x256xf32>
      %14 = vector.broadcast %13 : vector<1x256xf32> to vector<104x256xf32>
      %15 = arith.mulf %12, %14 : vector<104x256xf32>
      %c0_14 = arith.constant 0 : index
      %c0_15 = arith.constant 0 : index
      %16 = vector.load %arg6[%c0_14, %c0_15] : memref<1x256xf32, #tpu.memory_space<vmem>>, vector<1x256xf32>
      %17 = vector.broadcast %16 : vector<1x256xf32> to vector<104x256xf32>
      %18 = arith.addf %15, %17 : vector<104x256xf32>
      %c0_16 = arith.constant 0 : index
      %c0_17 = arith.constant 0 : index
      %19 = vector.load %arg7[%c0_16, %c0_17] : memref<104x256xf32, #tpu.memory_space<vmem>>, vector<104x256xf32>
      tpu.vector_store %arg7[%c0_16, %c0_17], %18 {strides = array<i32>} : memref<104x256xf32, #tpu.memory_space<vmem>>, vector<104x256xf32>,
    } else {
    }
    return
  }
  func.func @transform_0(%arg0: i32, %arg1: i32, %arg2: i32) -> (i32, i32) {
    %c0_i32 = arith.constant 0 : i32
    return %arg0, %arg2 : i32, i32
  }
  func.func @transform_1(%arg0: i32, %arg1: i32, %arg2: i32) -> (i32, i32) {
    %c0_i32 = arith.constant 0 : i32
    return %arg2, %arg1 : i32, i32
  }
  func.func @transform_2(%arg0: i32, %arg1: i32, %arg2: i32) -> (i32, i32) {
    %c0_i32 = arith.constant 0 : i32
    %c0_i32_0 = arith.constant 0 : i32
    return %c0_i32, %arg1 : i32, i32
  }
  func.func @transform_3(%arg0: i32, %arg1: i32, %arg2: i32) -> (i32, i32) {
    %c0_i32 = arith.constant 0 : i32
    %c0_i32_0 = arith.constant 0 : i32
    return %c0_i32, %arg1 : i32, i32
  }
  func.func @transform_4(%arg0: i32, %arg1: i32, %arg2: i32) -> (i32, i32) {
    %c0_i32 = arith.constant 0 : i32
    return %arg0, %arg1 : i32, i32
  }
}

</mosaic_0001>

<llo_original>
// kernel: _pallas_matmul_affine.1
$region0: #{_pallas_matmul_affine.1}
  #allocation0 [shape = 'u32[]', space=smem, size = 0x4, offset = 0x4, fixed_abs, tag = 'smem constant byte address 0x4 - core index']
  #allocation1 [shape = 'u32[144,128]{1,0:T(1,128)}', space=vmem, size = 0x12000, scoped, tag = 'internal scratch']
  #allocation2 [shape = 'f32[104,256]{1,0:T(8,128)}', space=vmem, size = 0x1a000, scoped, tag = 'scratch operand']
  %s0 = inlined_call_operand.vmem [shape: bf16[104,640], index: 0, kind: input, shape index: {}]
  %s1 = inlined_call_operand.vmem [shape: bf16[640,3072], index: 1, kind: input, shape index: {}]
  %s2 = inlined_call_operand.vmem [shape: f32[1,3072], index: 2, kind: input, shape index: {}]
  %s3 = inlined_call_operand.vmem [shape: f32[1,3072], index: 3, kind: input, shape index: {}]
  %s4 = inlined_call_operand.hbm [shape: f32[104,3072], index: 4, kind: output, shape index: {}]
  %s5 = sld [smem:[#allocation0]]
  $region95: #{_pallas_matmul_affine.1} parent=0
    _
  %s7 = ssub.s32 1, %s5
  %s8 = scalar_select 0, %s7, %s5
  $region1: #{_pallas_matmul_affine.1} parent=0
    #allocation3 [shape = 'u8[655360]{0}', space=vmem, size = 0xa0000, scoped, tag = 'input window, operand 1']
    #allocation4 [shape = 'u8[212992]{0}', space=vmem, size = 0x34000, scoped, tag = 'output window, operand 0']
    #allocation5 [shape = 's32[2]{0}', space=sflag, size = 0x8, scoped, tag = 'scoped memory for _pallas_matmul_affine.1']
    %9 = vsyncpa [#allocation5], 0
    %s10 = scalar_lea.sflag [#allocation5], 1
    %11 = vsyncpa %s10, 0
    loop: start=0, step=1, limit=14
    $region2: #{_pallas_matmul_affine.1} parent=1 // loop_pre_header
      _
    $region3: #{_pallas_matmul_affine.1} parent=1 // loop_header
      %s13 = sphi 0, %s17
      %p14 = scmp.ge.s32.totalorder %s13, 14
      %s20 = sphi 0, %s39
      %s21 = sphi 0, %s35
      %s22 = sphi 0, %s31
      %s23 = sphi 0, %s20
      %s24 = sphi 0, %s21
      %s25 = sphi 0, %s22
      %s26 = sphi 0, %s23
      %s27 = sphi 0, %s24
      %s28 = sphi 0, %s25
      %s44 = sphi 0, %s46
      %s47 = sphi 0, %s44
      %s48 = sphi 0, %s47
      %s64 = sphi 0, %s48
      %s72 = sphi 0, %s74
      %s75 = sphi 0, %s72
      %s76 = sphi 0, %s75
      %s92 = sphi 0, %s76
      %s98 = sphi 0, %s100
      %s101 = sphi 0, %s98
      %s102 = sphi 0, %s101
      %s118 = sphi 0, %s102
      %s124 = sphi 0, %s126
      %s127 = sphi 0, %s124
      %s128 = sphi 0, %s127
      %s144 = sphi 0, %s128
      %s152 = sphi 0, %s154
      %s155 = sphi 0, %s152
      %s156 = sphi 0, %s155
      %s172 = sphi 0, %s156
    $region4: #{_pallas_matmul_affine.1} parent=1 // loop_header_branch
      %16 = sbr.rel (%p14) target = $region8
    $region5: #{_pallas_matmul_affine.1} parent=1 // loop_body
      %s18 = ssub.s32 %s13, 1
      %s19 = ssub.s32 %s13, 2
      %s29 = sadd.s32 1, %s22
      %p30 = scmp.ge.s32.totalorder %s29, 1
      %s31 = scalar_select %p30, 0, %s29
      %s32 = sadd.s32 1, %s21
      %s33 = scalar_select %p30, %s32, %s21
      %p34 = scmp.ge.s32.totalorder %s33, 12
      %s35 = scalar_select %p34, 0, %s33
      %s36 = sadd.s32 1, %s20
      %s37 = scalar_select %p34, %s36, %s20
      %p38 = scmp.ge.s32.totalorder %s37, 1
      %s39 = scalar_select %p38, 0, %s37
      %s40 = ssub.s32 %s20, %s39
      %s41 = ssub.s32 %s22, %s31
      %s42 = sor.u32 %s40, %s41
      %p43 = scmp.eq.s32.totalorder %s42, 0
      %s45 = sadd.s32 %s44, 1
      %s46 = scalar_select %p43, %s44, %s45
      %p49 = pneg %p43
      %p50 = scmp.eq.s32.totalorder %s13, 11
      %p51 = por %p49, %p50
      %p52 = scmp.ne.s32.totalorder %s44, %s47
      %p53 = scmp.eq.s32.totalorder %s13, 0
      %p54 = por %p52, %p53
      %p55 = scmp.ne.s32.totalorder %s44, %s47
      %p56 = scmp.eq.s32.totalorder %s18, 11
      %p57 = por %p55, %p56
      %p58 = scmp.ne.s32.totalorder %s47, %s48
      %p59 = scmp.eq.s32.totalorder %s18, 0
      %p60 = por %p58, %p59
      %p61 = scmp.ne.s32.totalorder %s47, %s48
      %p62 = scmp.eq.s32.totalorder %s19, 11
      %p63 = por %p61, %p62
      %p65 = scmp.ne.s32.totalorder %s48, %s64
      %p66 = scmp.eq.s32.totalorder %s19, 0
      %p67 = por %p65, %p66
      %s68 = ssub.s32 %s22, %s31
      %s69 = ssub.s32 %s21, %s35
      %s70 = sor.u32 %s68, %s69
      %p71 = scmp.eq.s32.totalorder %s70, 0
      %s73 = sadd.s32 %s72, 1
      %s74 = scalar_select %p71, %s72, %s73
      %p77 = pneg %p71
      %p78 = scmp.eq.s32.totalorder %s13, 11
      %p79 = por %p77, %p78
      %p80 = scmp.ne.s32.totalorder %s72, %s75
      %p81 = scmp.eq.s32.totalorder %s13, 0
      %p82 = por %p80, %p81
      %p83 = scmp.ne.s32.totalorder %s72, %s75
      %p84 = scmp.eq.s32.totalorder %s18, 11
      %p85 = por %p83, %p84
      %p86 = scmp.ne.s32.totalorder %s75, %s76
      %p87 = scmp.eq.s32.totalorder %s18, 0
      %p88 = por %p86, %p87
      %p89 = scmp.ne.s32.totalorder %s75, %s76
      %p90 = scmp.eq.s32.totalorder %s19, 11
      %p91 = por %p89, %p90
      %p93 = scmp.ne.s32.totalorder %s76, %s92
      %p94 = scmp.eq.s32.totalorder %s19, 0
      %p95 = por %p93, %p94
      %s96 = ssub.s32 %s21, %s35
      %p97 = scmp.eq.s32.totalorder %s96, 0
      %s99 = sadd.s32 %s98, 1
      %s100 = scalar_select %p97, %s98, %s99
      %p103 = pneg %p97
      %p104 = scmp.eq.s32.totalorder %s13, 11
      %p105 = por %p103, %p104
      %p106 = scmp.ne.s32.totalorder %s98, %s101
      %p107 = scmp.eq.s32.totalorder %s13, 0
      %p108 = por %p106, %p107
      %p109 = scmp.ne.s32.totalorder %s98, %s101
      %p110 = scmp.eq.s32.totalorder %s18, 11
      %p111 = por %p109, %p110
      %p112 = scmp.ne.s32.totalorder %s101, %s102
      %p113 = scmp.eq.s32.totalorder %s18, 0
      %p114 = por %p112, %p113
      %p115 = scmp.ne.s32.totalorder %s101, %s102
      %p116 = scmp.eq.s32.totalorder %s19, 11
      %p117 = por %p115, %p116
      %p119 = scmp.ne.s32.totalorder %s102, %s118
      %p120 = scmp.eq.s32.totalorder %s19, 0
      %p121 = por %p119, %p120
      %s122 = ssub.s32 %s21, %s35
      %p123 = scmp.eq.s32.totalorder %s122, 0
      %s125 = sadd.s32 %s124, 1
      %s126 = scalar_select %p123, %s124, %s125
      %p129 = pneg %p123
      %p130 = scmp.eq.s32.totalorder %s13, 11
      %p131 = por %p129, %p130
      %p132 = scmp.ne.s32.totalorder %s124, %s127
      %p133 = scmp.eq.s32.totalorder %s13, 0
      %p134 = por %p132, %p133
      %p135 = scmp.ne.s32.totalorder %s124, %s127
      %p136 = scmp.eq.s32.totalorder %s18, 11
      %p137 = por %p135, %p136
      %p138 = scmp.ne.s32.totalorder %s127, %s128
      %p139 = scmp.eq.s32.totalorder %s18, 0
      %p140 = por %p138, %p139
      %p141 = scmp.ne.s32.totalorder %s127, %s128
      %p142 = scmp.eq.s32.totalorder %s19, 11
      %p143 = por %p141, %p142
      %p145 = scmp.ne.s32.totalorder %s128, %s144
      %p146 = scmp.eq.s32.totalorder %s19, 0
      %p147 = por %p145, %p146
      %s148 = ssub.s32 %s20, %s39
      %s149 = ssub.s32 %s21, %s35
      %s150 = sor.u32 %s148, %s149
      %p151 = scmp.eq.s32.totalorder %s150, 0
      %s153 = sadd.s32 %s152, 1
      %s154 = scalar_select %p151, %s152, %s153
      %p157 = pneg %p151
      %p158 = scmp.eq.s32.totalorder %s13, 11
      %p159 = por %p157, %p158
      %p160 = scmp.ne.s32.totalorder %s152, %s155
      %p161 = scmp.eq.s32.totalorder %s13, 0
      %p162 = por %p160, %p161
      %p163 = scmp.ne.s32.totalorder %s152, %s155
      %p164 = scmp.eq.s32.totalorder %s18, 11
      %p165 = por %p163, %p164
      %p166 = scmp.ne.s32.totalorder %s155, %s156
      %p167 = scmp.eq.s32.totalorder %s18, 0
      %p168 = por %p166, %p167
      %p169 = scmp.ne.s32.totalorder %s155, %s156
      %p170 = scmp.eq.s32.totalorder %s19, 11
      %p171 = por %p169, %p170
      %p173 = scmp.ne.s32.totalorder %s156, %s172
      %p174 = scmp.eq.s32.totalorder %s19, 0
      %p175 = por %p173, %p174
      %p176 = scmp.le.s32.totalorder 1, %s13
      %p177 = scmp.lt.s32.totalorder %s13, 13
      %p178 = pnand %p176, %p177
      %p179 = pneg %p178
      // Predicated region
      $region9: #{_pallas_matmul_affine.1} parent=5 // pred_check
        _
      $region10: #{_pallas_matmul_affine.1} parent=5 // pred_check_branch
        %181 = sbr.rel (%p178) target = $region12
      $region11: #{_pallas_matmul_affine.1} parent=5 // pred_region
        %s182 = ssub.s32 %s13, 1
        // Predicated region
        $region13: #{_pallas_matmul_affine.1} parent=11 // pred_check
          %p183 = pneg %p60
        $region14: #{_pallas_matmul_affine.1} parent=11 // pred_check_branch
          %185 = sbr.rel (%p183) target = $region16
        $region15: #{_pallas_matmul_affine.1} parent=11 // pred_region
          %s186 = smul.u32 13, %s23
          %s187 = smul.u32 5, %s25
          %p188 = scmp.lt.s32.totalorder %s186, 12
          %s189 = scalar_select %p188, %s186, 12
          %p190 = scmp.lt.s32.totalorder %s187, 4
          %s191 = scalar_select %p190, %s187, 4
          %s192 = smul.addr %s189, 5
          %s193 = sadd.s32 %s191, %s192
          %s194 = smul.addr %s193, 4
          %s195 = scalar_lea.vmem %s0, %s194
          %s196 = smul.u32 13, %s23
          %s197 = smul.u32 5, %s25
        $region16: #{_pallas_matmul_affine.1} parent=11 // pred_fallthru
          _
      $region12: #{_pallas_matmul_affine.1} parent=5 // pred_fallthru
        _
      %p198 = scmp.lt.s32.totalorder %s13, 12
      // Predicated region
      $region17: #{_pallas_matmul_affine.1} parent=5 // pred_check
        %p199 = pneg %p198
      $region18: #{_pallas_matmul_affine.1} parent=5 // pred_check_branch
        %201 = sbr.rel (%p199) target = $region20
      $region19: #{_pallas_matmul_affine.1} parent=5 // pred_region
        // Predicated region
        $region21: #{_pallas_matmul_affine.1} parent=19 // pred_check
          %p202 = pneg %p82
        $region22: #{_pallas_matmul_affine.1} parent=19 // pred_check_branch
          %204 = sbr.rel (%p202) target = $region24
        $region23: #{_pallas_matmul_affine.1} parent=19 // pred_region
          %s205 = sand.u32 %s72, 1
          %s206 = sand.u32 %s72, 1
          %s207 = smul.addr %s206, 640
          %s208 = scalar_lea.vmem [#allocation3], %s207
          %s209 = smul.u32 80, %s22
          %s210 = smul.u32 2, %s21
          %s211 = smul.addr %s209, 24
          %s212 = sadd.s32 %s210, %s211
          %s213 = smul.addr %s212, 4
          %s214 = scalar_lea.vmem %s1, %s213
          // Predicated region
          $region25: #{_pallas_matmul_affine.1} parent=23 // pred_check
            _
          $region26: #{_pallas_matmul_affine.1} parent=23 // pred_check_branch
            %216 = sbr.rel (0) target = $region28
          $region27: #{_pallas_matmul_affine.1} parent=23 // pred_region
            // Predicated region
            $region29: #{_pallas_matmul_affine.1} parent=27 // pred_check
              _
            $region30: #{_pallas_matmul_affine.1} parent=27 // pred_check_branch
              %218 = sbr.rel (0) target = $region32
            $region31: #{_pallas_matmul_affine.1} parent=27 // pred_region
              // Predicated region
              $region44: #{_pallas_matmul_affine.1} parent=31 // pred_check
                _
              $region45: #{_pallas_matmul_affine.1} parent=31 // pred_check_branch
                %392 = sbr.rel (0) target = $region47
              $region46: #{_pallas_matmul_affine.1} parent=31 // pred_region
                loop: start=0, step=1, limit=1
                $region48: #{_pallas_matmul_affine.1} parent=46 // loop_pre_header
                  _
                $region49: #{_pallas_matmul_affine.1} parent=46 // loop_header
                  %s394 = sphi 0, %s398
                  %p395 = scmp.ge.s32.totalorder %s394, 1
                  %s399 = sphi %s214, %s214
                  %s400 = sphi %s208, %s208
                $region50: #{_pallas_matmul_affine.1} parent=46 // loop_header_branch
                  %397 = sbr.rel (%p395) target = $region54
                $region51: #{_pallas_matmul_affine.1} parent=46 // loop_body
                  %v401 = vld [vmem:[%s399] sm:$0xff]
                  %402 = vst [vmem:[%s400] sm:$0xff] %v401
                  %v403 = vld [vmem:[%s399 + $0x60] sm:$0xff]
                  %404 = vst [vmem:[%s400 + $0x8] sm:$0xff] %v403
                  %v405 = vld [vmem:[%s399 + $0xc0] sm:$0xff]
                  %406 = vst [vmem:[%s400 + $0x10] sm:$0xff] %v405
                  %v407 = vld [vmem:[%s399 + $0x120] sm:$0xff]
                  %408 = vst [vmem:[%s400 + $0x18] sm:$0xff] %v407
                  %v409 = vld [vmem:[%s399 + $0x180] sm:$0xff]
                  %410 = vst [vmem:[%s400 + $0x20] sm:$0xff] %v409
                  %v411 = vld [vmem:[%s399 + $0x1e0] sm:$0xff]
                  %412 = vst [vmem:[%s400 + $0x28] sm:$0xff] %v411
                  %v413 = vld [vmem:[%s399 + $0x240] sm:$0xff]
                  %414 = vst [vmem:[%s400 + $0x30] sm:$0xff] %v413
                  %v415 = vld [vmem:[%s399 + $0x2a0] sm:$0xff]
                  %416 = vst [vmem:[%s400 + $0x38] sm:$0xff] %v415
                  %v417 = vld [vmem:[%s399 + $0x300] sm:$0xff]
                  %418 = vst [vmem:[%s400 + $0x40] sm:$0xff] %v417
                  %v419 = vld [vmem:[%s399 + $0x360] sm:$0xff]
                  %420 = vst [vmem:[%s400 + $0x48] sm:$0xff] %v419
                  %v421 = vld [vmem:[%s399 + $0x3c0] sm:$0xff]
                  %422 = vst [vmem:[%s400 + $0x50] sm:$0xff] %v421
                  %v423 = vld [vmem:[%s399 + $0x420] sm:$0xff]
                  %424 = vst [vmem:[%s400 + $0x58] sm:$0xff] %v423
                  %v425 = vld [vmem:[%s399 + $0x480] sm:$0xff]
                  %426 = vst [vmem:[%s400 + $0x60] sm:$0xff] %v425
                  %v427 = vld [vmem:[%s399 + $0x4e0] sm:$0xff]
                  %428 = vst [vmem:[%s400 + $0x68] sm:$0xff] %v427
                  %v429 = vld [vmem:[%s399 + $0x540] sm:$0xff]
                  %430 = vst [vmem:[%s400 + $0x70] sm:$0xff] %v429
                  %v431 = vld [vmem:[%s399 + $0x5a0] sm:$0xff]
                  %432 = vst [vmem:[%s400 + $0x78] sm:$0xff] %v431
                  %v433 = vld [vmem:[%s399 + $0x600] sm:$0xff]
                  %434 = vst [vmem:[%s400 + $0x80] sm:$0xff] %v433
                  %v435 = vld [vmem:[%s399 + $0x660] sm:$0xff]
                  %436 = vst [vmem:[%s400 + $0x88] sm:$0xff] %v435
                  %v437 = vld [vmem:[%s399 + $0x6c0] sm:$0xff]
                  %438 = vst [vmem:[%s400 + $0x90] sm:$0xff] %v437
                  %v439 = vld [vmem:[%s399 + $0x720] sm:$0xff]
                  %440 = vst [vmem:[%s400 + $0x98] sm:$0xff] %v439
                  %v441 = vld [vmem:[%s399 + $0x780] sm:$0xff]
                  %442 = vst [vmem:[%s400 + $0xa0] sm:$0xff] %v441
                  %v443 = vld [vmem:[%s399 + $0x7e0] sm:$0xff]
                  %444 = vst [vmem:[%s400 + $0xa8] sm:$0xff] %v443
                  %v445 = vld [vmem:[%s399 + $0x840] sm:$0xff]
                  %446 = vst [vmem:[%s400 + $0xb0] sm:$0xff] %v445
                  %v447 = vld [vmem:[%s399 + $0x8a0] sm:$0xff]
                  %448 = vst [vmem:[%s400 + $0xb8] sm:$0xff] %v447
                  %v449 = vld [vmem:[%s399 + $0x900] sm:$0xff]
                  %450 = vst [vmem:[%s400 + $0xc0] sm:$0xff] %v449
                  %v451 = vld [vmem:[%s399 + $0x960] sm:$0xff]
                  %452 = vst [vmem:[%s400 + $0xc8] sm:$0xff] %v451
                  %v453 = vld [vmem:[%s399 + $0x9c0] sm:$0xff]
                  %454 = vst [vmem:[%s400 + $0xd0] sm:$0xff] %v453
                  %v455 = vld [vmem:[%s399 + $0xa20] sm:$0xff]
                  %456 = vst [vmem:[%s400 + $0xd8] sm:$0xff] %v455
                  %v457 = vld [vmem:[%s399 + $0xa80] sm:$0xff]
                  %458 = vst [vmem:[%s400 + $0xe0] sm:$0xff] %v457
                  %v459 = vld [vmem:[%s399 + $0xae0] sm:$0xff]
                  %460 = vst [vmem:[%s400 + $0xe8] sm:$0xff] %v459
                  %v461 = vld [vmem:[%s399 + $0xb40] sm:$0xff]
                  %462 = vst [vmem:[%s400 + $0xf0] sm:$0xff] %v461
                  %v463 = vld [vmem:[%s399 + $0xba0] sm:$0xff]
                  %464 = vst [vmem:[%s400 + $0xf8] sm:$0xff] %v463
                  %v465 = vld [vmem:[%s399 + $0xc00] sm:$0xff]
                  %466 = vst [vmem:[%s400 + $0x100] sm:$0xff] %v465
                  %v467 = vld [vmem:[%s399 + $0xc60] sm:$0xff]
                  %468 = vst [vmem:[%s400 + $0x108] sm:$0xff] %v467
                  %v469 = vld [vmem:[%s399 + $0xcc0] sm:$0xff]
                  %470 = vst [vmem:[%s400 + $0x110] sm:$0xff] %v469
                  %v471 = vld [vmem:[%s399 + $0xd20] sm:$0xff]
                  %472 = vst [vmem:[%s400 + $0x118] sm:$0xff] %v471
                  %v473 = vld [vmem:[%s399 + $0xd80] sm:$0xff]
                  %474 = vst [vmem:[%s400 + $0x120] sm:$0xff] %v473
                  %v475 = vld [vmem:[%s399 + $0xde0] sm:$0xff]
                  %476 = vst [vmem:[%s400 + $0x128] sm:$0xff] %v475
                  %v477 = vld [vmem:[%s399 + $0xe40] sm:$0xff]
                  %478 = vst [vmem:[%s400 + $0x130] sm:$0xff] %v477
                  %v479 = vld [vmem:[%s399 + $0xea0] sm:$0xff]
                  %480 = vst [vmem:[%s400 + $0x138] sm:$0xff] %v479
                  %v481 = vld [vmem:[%s399 + $0xf00] sm:$0xff]
                  %482 = vst [vmem:[%s400 + $0x140] sm:$0xff] %v481
                  %v483 = vld [vmem:[%s399 + $0xf60] sm:$0xff]
                  %484 = vst [vmem:[%s400 + $0x148] sm:$0xff] %v483
                  %v485 = vld [vmem:[%s399 + $0xfc0] sm:$0xff]
                  %486 = vst [vmem:[%s400 + $0x150] sm:$0xff] %v485
                  %v487 = vld [vmem:[%s399 + $0x1020] sm:$0xff]
                  %488 = vst [vmem:[%s400 + $0x158] sm:$0xff] %v487
                  %v489 = vld [vmem:[%s399 + $0x1080] sm:$0xff]
                  %490 = vst [vmem:[%s400 + $0x160] sm:$0xff] %v489
                  %v491 = vld [vmem:[%s399 + $0x10e0] sm:$0xff]
                  %492 = vst [vmem:[%s400 + $0x168] sm:$0xff] %v491
                  %v493 = vld [vmem:[%s399 + $0x1140] sm:$0xff]
                  %494 = vst [vmem:[%s400 + $0x170] sm:$0xff] %v493
                  %v495 = vld [vmem:[%s399 + $0x11a0] sm:$0xff]
                  %496 = vst [vmem:[%s400 + $0x178] sm:$0xff] %v495
                  %v497 = vld [vmem:[%s399 + $0x1200] sm:$0xff]
                  %498 = vst [vmem:[%s400 + $0x180] sm:$0xff] %v497
                  %v499 = vld [vmem:[%s399 + $0x1260] sm:$0xff]
                  %500 = vst [vmem:[%s400 + $0x188] sm:$0xff] %v499
                  %v501 = vld [vmem:[%s399 + $0x12c0] sm:$0xff]
                  %502 = vst [vmem:[%s400 + $0x190] sm:$0xff] %v501
                  %v503 = vld [vmem:[%s399 + $0x1320] sm:$0xff]
                  %504 = vst [vmem:[%s400 + $0x198] sm:$0xff] %v503
                  %v505 = vld [vmem:[%s399 + $0x1380] sm:$0xff]
                  %506 = vst [vmem:[%s400 + $0x1a0] sm:$0xff] %v505
                  %v507 = vld [vmem:[%s399 + $0x13e0] sm:$0xff]
                  %508 = vst [vmem:[%s400 + $0x1a8] sm:$0xff] %v507
                  %v509 = vld [vmem:[%s399 + $0x1440] sm:$0xff]
                  %510 = vst [vmem:[%s400 + $0x1b0] sm:$0xff] %v509
                  %v511 = vld [vmem:[%s399 + $0x14a0] sm:$0xff]
                  %512 = vst [vmem:[%s400 + $0x1b8] sm:$0xff] %v511
                  %v513 = vld [vmem:[%s399 + $0x1500] sm:$0xff]
                  %514 = vst [vmem:[%s400 + $0x1c0] sm:$0xff] %v513
                  %v515 = vld [vmem:[%s399 + $0x1560] sm:$0xff]
                  %516 = vst [vmem:[%s400 + $0x1c8] sm:$0xff] %v515
                  %v517 = vld [vmem:[%s399 + $0x15c0] sm:$0xff]
                  %518 = vst [vmem:[%s400 + $0x1d0] sm:$0xff] %v517
                  %v519 = vld [vmem:[%s399 + $0x1620] sm:$0xff]
                  %520 = vst [vmem:[%s400 + $0x1d8] sm:$0xff] %v519
                  %v521 = vld [vmem:[%s399 + $0x1680] sm:$0xff]
                  %522 = vst [vmem:[%s400 + $0x1e0] sm:$0xff] %v521
                  %v523 = vld [vmem:[%s399 + $0x16e0] sm:$0xff]
                  %524 = vst [vmem:[%s400 + $0x1e8] sm:$0xff] %v523
                  %v525 = vld [vmem:[%s399 + $0x1740] sm:$0xff]
                  %526 = vst [vmem:[%s400 + $0x1f0] sm:$0xff] %v525
                  %v527 = vld [vmem:[%s399 + $0x17a0] sm:$0xff]
                  %528 = vst [vmem:[%s400 + $0x1f8] sm:$0xff] %v527
                  %v529 = vld [vmem:[%s399 + $0x1800] sm:$0xff]
                  %530 = vst [vmem:[%s400 + $0x200] sm:$0xff] %v529
                  %v531 = vld [vmem:[%s399 + $0x1860] sm:$0xff]
                  %532 = vst [vmem:[%s400 + $0x208] sm:$0xff] %v531
                  %v533 = vld [vmem:[%s399 + $0x18c0] sm:$0xff]
                  %534 = vst [vmem:[%s400 + $0x210] sm:$0xff] %v533
                  %v535 = vld [vmem:[%s399 + $0x1920] sm:$0xff]
                  %536 = vst [vmem:[%s400 + $0x218] sm:$0xff] %v535
                  %v537 = vld [vmem:[%s399 + $0x1980] sm:$0xff]
                  %538 = vst [vmem:[%s400 + $0x220] sm:$0xff] %v537
                  %v539 = vld [vmem:[%s399 + $0x19e0] sm:$0xff]
                  %540 = vst [vmem:[%s400 + $0x228] sm:$0xff] %v539
                  %v541 = vld [vmem:[%s399 + $0x1a40] sm:$0xff]
                  %542 = vst [vmem:[%s400 + $0x230] sm:$0xff] %v541
                  %v543 = vld [vmem:[%s399 + $0x1aa0] sm:$0xff]
                  %544 = vst [vmem:[%s400 + $0x238] sm:$0xff] %v543
                  %v545 = vld [vmem:[%s399 + $0x1b00] sm:$0xff]
                  %546 = vst [vmem:[%s400 + $0x240] sm:$0xff] %v545
                  %v547 = vld [vmem:[%s399 + $0x1b60] sm:$0xff]
                  %548 = vst [vmem:[%s400 + $0x248] sm:$0xff] %v547
                  %v549 = vld [vmem:[%s399 + $0x1bc0] sm:$0xff]
                  %550 = vst [vmem:[%s400 + $0x250] sm:$0xff] %v549
                  %v551 = vld [vmem:[%s399 + $0x1c20] sm:$0xff]
                  %552 = vst [vmem:[%s400 + $0x258] sm:$0xff] %v551
                  %v553 = vld [vmem:[%s399 + $0x1c80] sm:$0xff]
                  %554 = vst [vmem:[%s400 + $0x260] sm:$0xff] %v553
                  %v555 = vld [vmem:[%s399 + $0x1ce0] sm:$0xff]
                  %556 = vst [vmem:[%s400 + $0x268] sm:$0xff] %v555
                  %v557 = vld [vmem:[%s399 + $0x1d40] sm:$0xff]
                  %558 = vst [vmem:[%s400 + $0x270] sm:$0xff] %v557
                  %v559 = vld [vmem:[%s399 + $0x1da0] sm:$0xff]
                  %560 = vst [vmem:[%s400 + $0x278] sm:$0xff] %v559
                $region52: #{_pallas_matmul_affine.1} parent=46 // loop_footer
                  %s398 = sadd.s32 1, %s394
                $region53: #{_pallas_matmul_affine.1} parent=46 // loop_footer_branch
                  %393 = sbr.rel target = $region49
                $region54: #{_pallas_matmul_affine.1} parent=46 // loop_exit
                  _
              $region47: #{_pallas_matmul_affine.1} parent=31 // pred_fallthru
                _
              // Predicated region
              $region55: #{_pallas_matmul_affine.1} parent=31 // pred_check
                _
              $region56: #{_pallas_matmul_affine.1} parent=31 // pred_check_branch
                %562 = sbr.rel target = $region58
              $region57: #{_pallas_matmul_affine.1} parent=31 // pred_region
                _
              $region58: #{_pallas_matmul_affine.1} parent=31 // pred_fallthru
                _
            $region32: #{_pallas_matmul_affine.1} parent=27 // pred_fallthru
              _
            // Predicated region
            $region33: #{_pallas_matmul_affine.1} parent=27 // pred_check
              _
            $region34: #{_pallas_matmul_affine.1} parent=27 // pred_check_branch
              %220 = sbr.rel target = $region36
            $region35: #{_pallas_matmul_affine.1} parent=27 // pred_region
              %s222 = ssub.s32 256, 1
              loop: start=0, step=1, limit=1
              $region37: #{_pallas_matmul_affine.1} parent=35 // loop_pre_header
                _
              $region38: #{_pallas_matmul_affine.1} parent=35 // loop_header
                %s224 = sphi 0, %s228
                %p225 = scmp.ge.s32.totalorder %s224, 1
                %s229 = sphi %s214, %s214
                %s230 = sphi %s208, %s208
              $region39: #{_pallas_matmul_affine.1} parent=35 // loop_header_branch
                %227 = sbr.rel (%p225) target = $region43
              $region40: #{_pallas_matmul_affine.1} parent=35 // loop_body
                %v231 = vld [vmem:[%s229] sm:%s222]
                %232 = vst [vmem:[%s230] sm:%s222] %v231
                %v233 = vld [vmem:[%s229 + $0x60] sm:%s222]
                %234 = vst [vmem:[%s230 + $0x8] sm:%s222] %v233
                %v235 = vld [vmem:[%s229 + $0xc0] sm:%s222]
                %236 = vst [vmem:[%s230 + $0x10] sm:%s222] %v235
                %v237 = vld [vmem:[%s229 + $0x120] sm:%s222]
                %238 = vst [vmem:[%s230 + $0x18] sm:%s222] %v237
                %v239 = vld [vmem:[%s229 + $0x180] sm:%s222]
                %240 = vst [vmem:[%s230 + $0x20] sm:%s222] %v239
                %v241 = vld [vmem:[%s229 + $0x1e0] sm:%s222]
                %242 = vst [vmem:[%s230 + $0x28] sm:%s222] %v241
                %v243 = vld [vmem:[%s229 + $0x240] sm:%s222]
                %244 = vst [vmem:[%s230 + $0x30] sm:%s222] %v243
                %v245 = vld [vmem:[%s229 + $0x2a0] sm:%s222]
                %246 = vst [vmem:[%s230 + $0x38] sm:%s222] %v245
                %v247 = vld [vmem:[%s229 + $0x300] sm:%s222]
                %248 = vst [vmem:[%s230 + $0x40] sm:%s222] %v247
                %v249 = vld [vmem:[%s229 + $0x360] sm:%s222]
                %250 = vst [vmem:[%s230 + $0x48] sm:%s222] %v249
                %v251 = vld [vmem:[%s229 + $0x3c0] sm:%s222]
                %252 = vst [vmem:[%s230 + $0x50] sm:%s222] %v251
                %v253 = vld [vmem:[%s229 + $0x420] sm:%s222]
                %254 = vst [vmem:[%s230 + $0x58] sm:%s222] %v253
                %v255 = vld [vmem:[%s229 + $0x480] sm:%s222]
                %256 = vst [vmem:[%s230 + $0x60] sm:%s222] %v255
                %v257 = vld [vmem:[%s229 + $0x4e0] sm:%s222]
                %258 = vst [vmem:[%s230 + $0x68] sm:%s222] %v257
                %v259 = vld [vmem:[%s229 + $0x540] sm:%s222]
                %260 = vst [vmem:[%s230 + $0x70] sm:%s222] %v259
                %v261 = vld [vmem:[%s229 + $0x5a0] sm:%s222]
                %262 = vst [vmem:[%s230 + $0x78] sm:%s222] %v261
                %v263 = vld [vmem:[%s229 + $0x600] sm:%s222]
                %264 = vst [vmem:[%s230 + $0x80] sm:%s222] %v263
                %v265 = vld [vmem:[%s229 + $0x660] sm:%s222]
                %266 = vst [vmem:[%s230 + $0x88] sm:%s222] %v265
                %v267 = vld [vmem:[%s229 + $0x6c0] sm:%s222]
                %268 = vst [vmem:[%s230 + $0x90] sm:%s222] %v267
                %v269 = vld [vmem:[%s229 + $0x720] sm:%s222]
                %270 = vst [vmem:[%s230 + $0x98] sm:%s222] %v269
                %v271 = vld [vmem:[%s229 + $0x780] sm:%s222]
                %272 = vst [vmem:[%s230 + $0xa0] sm:%s222] %v271
                %v273 = vld [vmem:[%s229 + $0x7e0] sm:%s222]
                %274 = vst [vmem:[%s230 + $0xa8] sm:%s222] %v273
                %v275 = vld [vmem:[%s229 + $0x840] sm:%s222]
                %276 = vst [vmem:[%s230 + $0xb0] sm:%s222] %v275
                %v277 = vld [vmem:[%s229 + $0x8a0] sm:%s222]
                %278 = vst [vmem:[%s230 + $0xb8] sm:%s222] %v277
                %v279 = vld [vmem:[%s229 + $0x900] sm:%s222]
                %280 = vst [vmem:[%s230 + $0xc0] sm:%s222] %v279
                %v281 = vld [vmem:[%s229 + $0x960] sm:%s222]
                %282 = vst [vmem:[%s230 + $0xc8] sm:%s222] %v281
                %v283 = vld [vmem:[%s229 + $0x9c0] sm:%s222]
                %284 = vst [vmem:[%s230 + $0xd0] sm:%s222] %v283
                %v285 = vld [vmem:[%s229 + $0xa20] sm:%s222]
                %286 = vst [vmem:[%s230 + $0xd8] sm:%s222] %v285
                %v287 = vld [vmem:[%s229 + $0xa80] sm:%s222]
                %288 = vst [vmem:[%s230 + $0xe0] sm:%s222] %v287
                %v289 = vld [vmem:[%s229 + $0xae0] sm:%s222]
                %290 = vst [vmem:[%s230 + $0xe8] sm:%s222] %v289
                %v291 = vld [vmem:[%s229 + $0xb40] sm:%s222]
                %292 = vst [vmem:[%s230 + $0xf0] sm:%s222] %v291
                %v293 = vld [vmem:[%s229 + $0xba0] sm:%s222]
                %294 = vst [vmem:[%s230 + $0xf8] sm:%s222] %v293
                %v295 = vld [vmem:[%s229 + $0xc00] sm:%s222]
                %296 = vst [vmem:[%s230 + $0x100] sm:%s222] %v295
                %v297 = vld [vmem:[%s229 + $0xc60] sm:%s222]
                %298 = vst [vmem:[%s230 + $0x108] sm:%s222] %v297
                %v299 = vld [vmem:[%s229 + $0xcc0] sm:%s222]
                %300 = vst [vmem:[%s230 + $0x110] sm:%s222] %v299
                %v301 = vld [vmem:[%s229 + $0xd20] sm:%s222]
                %302 = vst [vmem:[%s230 + $0x118] sm:%s222] %v301
                %v303 = vld [vmem:[%s229 + $0xd80] sm:%s222]
                %304 = vst [vmem:[%s230 + $0x120] sm:%s222] %v303
                %v305 = vld [vmem:[%s229 + $0xde0] sm:%s222]
                %306 = vst [vmem:[%s230 + $0x128] sm:%s222] %v305
                %v307 = vld [vmem:[%s229 + $0xe40] sm:%s222]
                %308 = vst [vmem:[%s230 + $0x130] sm:%s222] %v307
                %v309 = vld [vmem:[%s229 + $0xea0] sm:%s222]
                %310 = vst [vmem:[%s230 + $0x138] sm:%s222] %v309
                %v311 = vld [vmem:[%s229 + $0xf00] sm:%s222]
                %312 = vst [vmem:[%s230 + $0x140] sm:%s222] %v311
                %v313 = vld [vmem:[%s229 + $0xf60] sm:%s222]
                %314 = vst [vmem:[%s230 + $0x148] sm:%s222] %v313
                %v315 = vld [vmem:[%s229 + $0xfc0] sm:%s222]
                %316 = vst [vmem:[%s230 + $0x150] sm:%s222] %v315
                %v317 = vld [vmem:[%s229 + $0x1020] sm:%s222]
                %318 = vst [vmem:[%s230 + $0x158] sm:%s222] %v317
                %v319 = vld [vmem:[%s229 + $0x1080] sm:%s222]
                %320 = vst [vmem:[%s230 + $0x160] sm:%s222] %v319
                %v321 = vld [vmem:[%s229 + $0x10e0] sm:%s222]
                %322 = vst [vmem:[%s230 + $0x168] sm:%s222] %v321
                %v323 = vld [vmem:[%s229 + $0x1140] sm:%s222]
                %324 = vst [vmem:[%s230 + $0x170] sm:%s222] %v323
                %v325 = vld [vmem:[%s229 + $0x11a0] sm:%s222]
                %326 = vst [vmem:[%s230 + $0x178] sm:%s222] %v325
                %v327 = vld [vmem:[%s229 + $0x1200] sm:%s222]
                %328 = vst [vmem:[%s230 + $0x180] sm:%s222] %v327
                %v329 = vld [vmem:[%s229 + $0x1260] sm:%s222]
                %330 = vst [vmem:[%s230 + $0x188] sm:%s222] %v329
                %v331 = vld [vmem:[%s229 + $0x12c0] sm:%s222]
                %332 = vst [vmem:[%s230 + $0x190] sm:%s222] %v331
                %v333 = vld [vmem:[%s229 + $0x1320] sm:%s222]
                %334 = vst [vmem:[%s230 + $0x198] sm:%s222] %v333
                %v335 = vld [vmem:[%s229 + $0x1380] sm:%s222]
                %336 = vst [vmem:[%s230 + $0x1a0] sm:%s222] %v335
                %v337 = vld [vmem:[%s229 + $0x13e0] sm:%s222]
                %338 = vst [vmem:[%s230 + $0x1a8] sm:%s222] %v337
                %v339 = vld [vmem:[%s229 + $0x1440] sm:%s222]
                %340 = vst [vmem:[%s230 + $0x1b0] sm:%s222] %v339
                %v341 = vld [vmem:[%s229 + $0x14a0] sm:%s222]
                %342 = vst [vmem:[%s230 + $0x1b8] sm:%s222] %v341
                %v343 = vld [vmem:[%s229 + $0x1500] sm:%s222]
                %344 = vst [vmem:[%s230 + $0x1c0] sm:%s222] %v343
                %v345 = vld [vmem:[%s229 + $0x1560] sm:%s222]
                %346 = vst [vmem:[%s230 + $0x1c8] sm:%s222] %v345
                %v347 = vld [vmem:[%s229 + $0x15c0] sm:%s222]
                %348 = vst [vmem:[%s230 + $0x1d0] sm:%s222] %v347
                %v349 = vld [vmem:[%s229 + $0x1620] sm:%s222]
                %350 = vst [vmem:[%s230 + $0x1d8] sm:%s222] %v349
                %v351 = vld [vmem:[%s229 + $0x1680] sm:%s222]
                %352 = vst [vmem:[%s230 + $0x1e0] sm:%s222] %v351
                %v353 = vld [vmem:[%s229 + $0x16e0] sm:%s222]
                %354 = vst [vmem:[%s230 + $0x1e8] sm:%s222] %v353
                %v355 = vld [vmem:[%s229 + $0x1740] sm:%s222]
                %356 = vst [vmem:[%s230 + $0x1f0] sm:%s222] %v355
                %v357 = vld [vmem:[%s229 + $0x17a0] sm:%s222]
                %358 = vst [vmem:[%s230 + $0x1f8] sm:%s222] %v357
                %v359 = vld [vmem:[%s229 + $0x1800] sm:%s222]
                %360 = vst [vmem:[%s230 + $0x200] sm:%s222] %v359
                %v361 = vld [vmem:[%s229 + $0x1860] sm:%s222]
                %362 = vst [vmem:[%s230 + $0x208] sm:%s222] %v361
                %v363 = vld [vmem:[%s229 + $0x18c0] sm:%s222]
                %364 = vst [vmem:[%s230 + $0x210] sm:%s222] %v363
                %v365 = vld [vmem:[%s229 + $0x1920] sm:%s222]
                %366 = vst [vmem:[%s230 + $0x218] sm:%s222] %v365
                %v367 = vld [vmem:[%s229 + $0x1980] sm:%s222]
                %368 = vst [vmem:[%s230 + $0x220] sm:%s222] %v367
                %v369 = vld [vmem:[%s229 + $0x19e0] sm:%s222]
                %370 = vst [vmem:[%s230 + $0x228] sm:%s222] %v369
                %v371 = vld [vmem:[%s229 + $0x1a40] sm:%s222]
                %372 = vst [vmem:[%s230 + $0x230] sm:%s222] %v371
                %v373 = vld [vmem:[%s229 + $0x1aa0] sm:%s222]
                %374 = vst [vmem:[%s230 + $0x238] sm:%s222] %v373
                %v375 = vld [vmem:[%s229 + $0x1b00] sm:%s222]
                %376 = vst [vmem:[%s230 + $0x240] sm:%s222] %v375
                %v377 = vld [vmem:[%s229 + $0x1b60] sm:%s222]
                %378 = vst [vmem:[%s230 + $0x248] sm:%s222] %v377
                %v379 = vld [vmem:[%s229 + $0x1bc0] sm:%s222]
                %380 = vst [vmem:[%s230 + $0x250] sm:%s222] %v379
                %v381 = vld [vmem:[%s229 + $0x1c20] sm:%s222]
                %382 = vst [vmem:[%s230 + $0x258] sm:%s222] %v381
                %v383 = vld [vmem:[%s229 + $0x1c80] sm:%s222]
                %384 = vst [vmem:[%s230 + $0x260] sm:%s222] %v383
                %v385 = vld [vmem:[%s229 + $0x1ce0] sm:%s222]
                %386 = vst [vmem:[%s230 + $0x268] sm:%s222] %v385
                %v387 = vld [vmem:[%s229 + $0x1d40] sm:%s222]
                %388 = vst [vmem:[%s230 + $0x270] sm:%s222] %v387
                %v389 = vld [vmem:[%s229 + $0x1da0] sm:%s222]
                %390 = vst [vmem:[%s230 + $0x278] sm:%s222] %v389
              $region41: #{_pallas_matmul_affine.1} parent=35 // loop_footer
                %s228 = sadd.s32 1, %s224
              $region42: #{_pallas_matmul_affine.1} parent=35 // loop_footer_branch
                %223 = sbr.rel target = $region38
              $region43: #{_pallas_matmul_affine.1} parent=35 // loop_exit
                _
            $region36: #{_pallas_matmul_affine.1} parent=27 // pred_fallthru
              _
          $region28: #{_pallas_matmul_affine.1} parent=23 // pred_fallthru
            _
          %563 = vnop
        $region24: #{_pallas_matmul_affine.1} parent=19 // pred_fallthru
          _
        // Predicated region
        $region59: #{_pallas_matmul_affine.1} parent=19 // pred_check
          %p564 = pneg %p108
        $region60: #{_pallas_matmul_affine.1} parent=19 // pred_check_branch
          %566 = sbr.rel (%p564) target = $region62
        $region61: #{_pallas_matmul_affine.1} parent=19 // pred_region
          %s567 = smul.u32 2, %s21
          %p568 = scmp.lt.s32.totalorder %s567, 23
          %s569 = scalar_select %p568, %s567, 23
          %s570 = scalar_lea.vmem %s2, %s569
          %s571 = smul.u32 2, %s21
        $region62: #{_pallas_matmul_affine.1} parent=19 // pred_fallthru
          _
        // Predicated region
        $region63: #{_pallas_matmul_affine.1} parent=19 // pred_check
          %p572 = pneg %p134
        $region64: #{_pallas_matmul_affine.1} parent=19 // pred_check_branch
          %574 = sbr.rel (%p572) target = $region66
        $region65: #{_pallas_matmul_affine.1} parent=19 // pred_region
          %s575 = smul.u32 2, %s21
          %p576 = scmp.lt.s32.totalorder %s575, 23
          %s577 = scalar_select %p576, %s575, 23
          %s578 = scalar_lea.vmem %s3, %s577
          %s579 = smul.u32 2, %s21
        $region66: #{_pallas_matmul_affine.1} parent=19 // pred_fallthru
          _
      $region20: #{_pallas_matmul_affine.1} parent=5 // pred_fallthru
        _
      %p580 = scmp.le.s32.totalorder 1, %s13
      %p581 = scmp.lt.s32.totalorder %s13, 13
      %p582 = pnand %p580, %p581
      %p583 = pneg %p582
      // Predicated region
      $region67: #{_pallas_matmul_affine.1} parent=5 // pred_check
        _
      $region68: #{_pallas_matmul_affine.1} parent=5 // pred_check_branch
        %585 = sbr.rel (%p582) target = $region70
      $region69: #{_pallas_matmul_affine.1} parent=5 // pred_region
        %s586 = ssub.s32 %s13, 1
        %s587 = sand.u32 %s75, 1
        %s588 = sand.u32 %s75, 1
        %s589 = smul.addr %s588, 640
        %s590 = scalar_lea.vmem [#allocation3], %s589
        // Predicated region
        $region71: #{_pallas_matmul_affine.1} parent=69 // pred_check
          %p591 = pneg %p88
        $region72: #{_pallas_matmul_affine.1} parent=69 // pred_check_branch
          %593 = sbr.rel (%p591) target = $region74
        $region73: #{_pallas_matmul_affine.1} parent=69 // pred_region
          _
        $region74: #{_pallas_matmul_affine.1} parent=69 // pred_fallthru
          _
        %s594 = smul.u32 13, %s23
        %s595 = smul.u32 5, %s25
        %p596 = scmp.lt.s32.totalorder %s594, 12
        %s597 = scalar_select %p596, %s594, 12
        %p598 = scmp.lt.s32.totalorder %s595, 4
        %s599 = scalar_select %p598, %s595, 4
        %s600 = smul.addr %s597, 5
        %s601 = sadd.s32 %s599, %s600
        %s602 = smul.addr %s601, 4
        %s603 = scalar_lea.vmem %s0, %s602
        %p604 = pneg %p60
        %p605 = pneg %p57
        %s606 = sand.u32 %s75, 1
        %s607 = sand.u32 %s75, 1
        %s608 = smul.addr %s607, 640
        %s609 = scalar_lea.vmem [#allocation3], %s608
        %p610 = pneg %p88
        %p611 = pneg %p85
        %s612 = smul.u32 2, %s24
        %p613 = scmp.lt.s32.totalorder %s612, 23
        %s614 = scalar_select %p613, %s612, 23
        %s615 = scalar_lea.vmem %s2, %s614
        %p616 = pneg %p114
        %p617 = pneg %p111
        %s618 = smul.u32 2, %s24
        %p619 = scmp.lt.s32.totalorder %s618, 23
        %s620 = scalar_select %p619, %s618, 23
        %s621 = scalar_lea.vmem %s3, %s620
        %p622 = pneg %p140
        %p623 = pneg %p137
        %p624 = pneg %p168
        %p625 = pneg %p165
        %s626 = sand.u32 %s155, 1
        %s627 = scalar_lea.sflag [#allocation5], %s626
        %s628 = sand.u32 %s155, 1
        %s629 = smul.addr %s628, 208
        %s630 = scalar_lea.vmem [#allocation4], %s629
        %s631 = smul.u32 13, %s23
        %s632 = smul.u32 5, %s25
        %p633 = scmp.lt.s32.totalorder %s631, 12
        %s634 = scalar_select %p633, %s631, 12
        %p635 = scmp.lt.s32.totalorder %s632, 4
        %s636 = scalar_select %p635, %s632, 4
        %s637 = smul.addr %s634, 5
        %s638 = sadd.s32 %s636, %s637
        %s639 = smul.addr %s638, 4
        %s640 = scalar_lea.vmem %s0, %s639
        %s641 = smul.u32 13, %s23
        %s642 = smul.u32 5, %s25
        %s643 = smul.u32 80, %s25
        %s644 = smul.u32 2, %s24
        %s645 = smul.u32 2, %s24
        %p646 = scmp.lt.s32.totalorder %s645, 23
        %s647 = scalar_select %p646, %s645, 23
        %s648 = scalar_lea.vmem %s2, %s647
        %s649 = smul.u32 2, %s24
        %s650 = smul.u32 2, %s24
        %p651 = scmp.lt.s32.totalorder %s650, 23
        %s652 = scalar_select %p651, %s650, 23
        %s653 = scalar_lea.vmem %s3, %s652
        %s654 = smul.u32 2, %s24
        %s655 = smul.u32 13, %s23
        %s656 = smul.u32 2, %s24
        %p658 = scmp.eq.s32.totalorder %s25, 0
        // Predicated region
        $region75: #{_pallas_matmul_affine.1} parent=69 // pred_check
          %p659 = pneg %p658
        $region76: #{_pallas_matmul_affine.1} parent=69 // pred_check_branch
          %661 = sbr.rel (%p659) target = $region78
        $region77: #{_pallas_matmul_affine.1} parent=69 // pred_region
          %662 = vst [vmem:[#allocation2] sm:$0xff] 0.0
          %663 = vst [vmem:[#allocation2 + $0x8] sm:$0xff] 0.0
          %664 = vst [vmem:[#allocation2 + $0x10] sm:$0xff] 0.0
          %665 = vst [vmem:[#allocation2 + $0x18] sm:$0xff] 0.0
          %666 = vst [vmem:[#allocation2 + $0x20] sm:$0xff] 0.0
          %667 = vst [vmem:[#allocation2 + $0x28] sm:$0xff] 0.0
          %668 = vst [vmem:[#allocation2 + $0x30] sm:$0xff] 0.0
          %669 = vst [vmem:[#allocation2 + $0x38] sm:$0xff] 0.0
          %670 = vst [vmem:[#allocation2 + $0x40] sm:$0xff] 0.0
          %671 = vst [vmem:[#allocation2 + $0x48] sm:$0xff] 0.0
          %672 = vst [vmem:[#allocation2 + $0x50] sm:$0xff] 0.0
          %673 = vst [vmem:[#allocation2 + $0x58] sm:$0xff] 0.0
          %674 = vst [vmem:[#allocation2 + $0x60] sm:$0xff] 0.0
          %675 = vst [vmem:[#allocation2 + $0x68] sm:$0xff] 0.0
          %676 = vst [vmem:[#allocation2 + $0x70] sm:$0xff] 0.0
          %677 = vst [vmem:[#allocation2 + $0x78] sm:$0xff] 0.0
          %678 = vst [vmem:[#allocation2 + $0x80] sm:$0xff] 0.0
          %679 = vst [vmem:[#allocation2 + $0x88] sm:$0xff] 0.0
          %680 = vst [vmem:[#allocation2 + $0x90] sm:$0xff] 0.0
          %681 = vst [vmem:[#allocation2 + $0x98] sm:$0xff] 0.0
          %682 = vst [vmem:[#allocation2 + $0xa0] sm:$0xff] 0.0
          %683 = vst [vmem:[#allocation2 + $0xa8] sm:$0xff] 0.0
          %684 = vst [vmem:[#allocation2 + $0xb0] sm:$0xff] 0.0
          %685 = vst [vmem:[#allocation2 + $0xb8] sm:$0xff] 0.0
          %686 = vst [vmem:[#allocation2 + $0xc0] sm:$0xff] 0.0
          %687 = vst [vmem:[#allocation2 + $0xc8] sm:$0xff] 0.0
        $region78: #{_pallas_matmul_affine.1} parent=69 // pred_fallthru
          _
        %v688 = vld [vmem:[#allocation2] sm:$0xff]
        %v689 = vld [vmem:[#allocation2 + $0x8] sm:$0xff]
        %v690 = vld [vmem:[#allocation2 + $0x10] sm:$0xff]
        %v691 = vld [vmem:[#allocation2 + $0x18] sm:$0xff]
        %v692 = vld [vmem:[#allocation2 + $0x20] sm:$0xff]
        %v693 = vld [vmem:[#allocation2 + $0x28] sm:$0xff]
        %v694 = vld [vmem:[#allocation2 + $0x30] sm:$0xff]
        %v695 = vld [vmem:[#allocation2 + $0x38] sm:$0xff]
        %v696 = vld [vmem:[#allocation2 + $0x40] sm:$0xff]
        %v697 = vld [vmem:[#allocation2 + $0x48] sm:$0xff]
        %v698 = vld [vmem:[#allocation2 + $0x50] sm:$0xff]
        %v699 = vld [vmem:[#allocation2 + $0x58] sm:$0xff]
        %v700 = vld [vmem:[#allocation2 + $0x60] sm:$0xff]
        %v701 = vld [vmem:[#allocation2 + $0x68] sm:$0xff]
        %v702 = vld [vmem:[#allocation2 + $0x70] sm:$0xff]
        %v703 = vld [vmem:[#allocation2 + $0x78] sm:$0xff]
        %v704 = vld [vmem:[#allocation2 + $0x80] sm:$0xff]
        %v705 = vld [vmem:[#allocation2 + $0x88] sm:$0xff]
        %v706 = vld [vmem:[#allocation2 + $0x90] sm:$0xff]
        %v707 = vld [vmem:[#allocation2 + $0x98] sm:$0xff]
        %v708 = vld [vmem:[#allocation2 + $0xa0] sm:$0xff]
        %v709 = vld [vmem:[#allocation2 + $0xa8] sm:$0xff]
        %v710 = vld [vmem:[#allocation2 + $0xb0] sm:$0xff]
        %v711 = vld [vmem:[#allocation2 + $0xb8] sm:$0xff]
        %v712 = vld [vmem:[#allocation2 + $0xc0] sm:$0xff]
        %v713 = vld [vmem:[#allocation2 + $0xc8] sm:$0xff]
        %v714 = vld [vmem:[%s640] sm:$0xff]
        %v715 = vld [vmem:[%s640 + $0x8] sm:$0xff]
        %v716 = vld [vmem:[%s640 + $0x10] sm:$0xf]
        %v717 = vld [vmem:[%s640 + $0x14] sm:$0xff]
        %v718 = vld [vmem:[%s640 + $0x1c] sm:$0xff]
        %v719 = vld [vmem:[%s640 + $0x24] sm:$0xf]
        %v720 = vld [vmem:[%s640 + $0x28] sm:$0xff]
        %v721 = vld [vmem:[%s640 + $0x30] sm:$0xff]
        %v722 = vld [vmem:[%s640 + $0x38] sm:$0xf]
        %v723 = vld [vmem:[%s640 + $0x3c] sm:$0xff]
        %v724 = vld [vmem:[%s640 + $0x44] sm:$0xff]
        %v725 = vld [vmem:[%s640 + $0x4c] sm:$0xf]
        %v726 = vld [vmem:[%s640 + $0x50] sm:$0xff]
        %v727 = vld [vmem:[%s640 + $0x58] sm:$0xff]
        %v728 = vld [vmem:[%s640 + $0x60] sm:$0xf]
        %v729 = vld [vmem:[%s640 + $0x64] sm:$0xff]
        %v730 = vld [vmem:[%s640 + $0x6c] sm:$0xff]
        %v731 = vld [vmem:[%s640 + $0x74] sm:$0xf]
        %v732 = vld [vmem:[%s640 + $0x78] sm:$0xff]
        %v733 = vld [vmem:[%s640 + $0x80] sm:$0xff]
        %v734 = vld [vmem:[%s640 + $0x88] sm:$0xf]
        %v735 = vld [vmem:[%s640 + $0x8c] sm:$0xff]
        %v736 = vld [vmem:[%s640 + $0x94] sm:$0xff]
        %v737 = vld [vmem:[%s640 + $0x9c] sm:$0xf]
        %v738 = vld [vmem:[%s640 + $0xa0] sm:$0xff]
        %v739 = vld [vmem:[%s640 + $0xa8] sm:$0xff]
        %v740 = vld [vmem:[%s640 + $0xb0] sm:$0xf]
        %v741 = vld [vmem:[%s640 + $0xb4] sm:$0xff]
        %v742 = vld [vmem:[%s640 + $0xbc] sm:$0xff]
        %v743 = vld [vmem:[%s640 + $0xc4] sm:$0xf]
        %v744 = vld [vmem:[%s640 + $0xc8] sm:$0xff]
        %v745 = vld [vmem:[%s640 + $0xd0] sm:$0xff]
        %v746 = vld [vmem:[%s640 + $0xd8] sm:$0xf]
        %v747 = vld [vmem:[%s640 + $0xdc] sm:$0xff]
        %v748 = vld [vmem:[%s640 + $0xe4] sm:$0xff]
        %v749 = vld [vmem:[%s640 + $0xec] sm:$0xf]
        %v750 = vld [vmem:[%s640 + $0xf0] sm:$0xff]
        %v751 = vld [vmem:[%s640 + $0xf8] sm:$0xff]
        %v752 = vld [vmem:[%s640 + $0x100] sm:$0xf]
        %v753 = vld [vmem:[%s590] sm:$0xff]
        %v754 = vld [vmem:[%s590 + $0x8] sm:$0xff]
        %v755 = vld [vmem:[%s590 + $0x10] sm:$0xff]
        %v756 = vld [vmem:[%s590 + $0x18] sm:$0xff]
        %v757 = vld [vmem:[%s590 + $0x20] sm:$0xff]
        %v758 = vld [vmem:[%s590 + $0x28] sm:$0xff]
        %v759 = vld [vmem:[%s590 + $0x30] sm:$0xff]
        %v760 = vld [vmem:[%s590 + $0x38] sm:$0xff]
        %v761 = vld [vmem:[%s590 + $0x40] sm:$0xff]
        %v762 = vld [vmem:[%s590 + $0x48] sm:$0xff]
        %v763 = vld [vmem:[%s590 + $0x50] sm:$0xff]
        %v764 = vld [vmem:[%s590 + $0x58] sm:$0xff]
        %v765 = vld [vmem:[%s590 + $0x60] sm:$0xff]
        %v766 = vld [vmem:[%s590 + $0x68] sm:$0xff]
        %v767 = vld [vmem:[%s590 + $0x70] sm:$0xff]
        %v768 = vld [vmem:[%s590 + $0x78] sm:$0xff]
        %v769 = vld [vmem:[%s590 + $0x80] sm:$0xff]
        %v770 = vld [vmem:[%s590 + $0x88] sm:$0xff]
        %v771 = vld [vmem:[%s590 + $0x90] sm:$0xff]
        %v772 = vld [vmem:[%s590 + $0x98] sm:$0xff]
        %v773 = vld [vmem:[%s590 + $0xa0] sm:$0xff]
        %v774 = vld [vmem:[%s590 + $0xa8] sm:$0xff]
        %v775 = vld [vmem:[%s590 + $0xb0] sm:$0xff]
        %v776 = vld [vmem:[%s590 + $0xb8] sm:$0xff]
        %v777 = vld [vmem:[%s590 + $0xc0] sm:$0xff]
        %v778 = vld [vmem:[%s590 + $0xc8] sm:$0xff]
        %v779 = vld [vmem:[%s590 + $0xd0] sm:$0xff]
        %v780 = vld [vmem:[%s590 + $0xd8] sm:$0xff]
        %v781 = vld [vmem:[%s590 + $0xe0] sm:$0xff]
        %v782 = vld [vmem:[%s590 + $0xe8] sm:$0xff]
        %v783 = vld [vmem:[%s590 + $0xf0] sm:$0xff]
        %v784 = vld [vmem:[%s590 + $0xf8] sm:$0xff]
        %v785 = vld [vmem:[%s590 + $0x100] sm:$0xff]
        %v786 = vld [vmem:[%s590 + $0x108] sm:$0xff]
        %v787 = vld [vmem:[%s590 + $0x110] sm:$0xff]
        %v788 = vld [vmem:[%s590 + $0x118] sm:$0xff]
        %v789 = vld [vmem:[%s590 + $0x120] sm:$0xff]
        %v790 = vld [vmem:[%s590 + $0x128] sm:$0xff]
        %v791 = vld [vmem:[%s590 + $0x130] sm:$0xff]
        %v792 = vld [vmem:[%s590 + $0x138] sm:$0xff]
        %v793 = vld [vmem:[%s590 + $0x140] sm:$0xff]
        %v794 = vld [vmem:[%s590 + $0x148] sm:$0xff]
        %v795 = vld [vmem:[%s590 + $0x150] sm:$0xff]
        %v796 = vld [vmem:[%s590 + $0x158] sm:$0xff]
        %v797 = vld [vmem:[%s590 + $0x160] sm:$0xff]
        %v798 = vld [vmem:[%s590 + $0x168] sm:$0xff]
        %v799 = vld [vmem:[%s590 + $0x170] sm:$0xff]
        %v800 = vld [vmem:[%s590 + $0x178] sm:$0xff]
        %v801 = vld [vmem:[%s590 + $0x180] sm:$0xff]
        %v802 = vld [vmem:[%s590 + $0x188] sm:$0xff]
        %v803 = vld [vmem:[%s590 + $0x190] sm:$0xff]
        %v804 = vld [vmem:[%s590 + $0x198] sm:$0xff]
        %v805 = vld [vmem:[%s590 + $0x1a0] sm:$0xff]
        %v806 = vld [vmem:[%s590 + $0x1a8] sm:$0xff]
        %v807 = vld [vmem:[%s590 + $0x1b0] sm:$0xff]
        %v808 = vld [vmem:[%s590 + $0x1b8] sm:$0xff]
        %v809 = vld [vmem:[%s590 + $0x1c0] sm:$0xff]
        %v810 = vld [vmem:[%s590 + $0x1c8] sm:$0xff]
        %v811 = vld [vmem:[%s590 + $0x1d0] sm:$0xff]
        %v812 = vld [vmem:[%s590 + $0x1d8] sm:$0xff]
        %v813 = vld [vmem:[%s590 + $0x1e0] sm:$0xff]
        %v814 = vld [vmem:[%s590 + $0x1e8] sm:$0xff]
        %v815 = vld [vmem:[%s590 + $0x1f0] sm:$0xff]
        %v816 = vld [vmem:[%s590 + $0x1f8] sm:$0xff]
        %v817 = vld [vmem:[%s590 + $0x200] sm:$0xff]
        %v818 = vld [vmem:[%s590 + $0x208] sm:$0xff]
        %v819 = vld [vmem:[%s590 + $0x210] sm:$0xff]
        %v820 = vld [vmem:[%s590 + $0x218] sm:$0xff]
        %v821 = vld [vmem:[%s590 + $0x220] sm:$0xff]
        %v822 = vld [vmem:[%s590 + $0x228] sm:$0xff]
        %v823 = vld [vmem:[%s590 + $0x230] sm:$0xff]
        %v824 = vld [vmem:[%s590 + $0x238] sm:$0xff]
        %v825 = vld [vmem:[%s590 + $0x240] sm:$0xff]
        %v826 = vld [vmem:[%s590 + $0x248] sm:$0xff]
        %v827 = vld [vmem:[%s590 + $0x250] sm:$0xff]
        %v828 = vld [vmem:[%s590 + $0x258] sm:$0xff]
        %v829 = vld [vmem:[%s590 + $0x260] sm:$0xff]
        %v830 = vld [vmem:[%s590 + $0x268] sm:$0xff]
        %v831 = vld [vmem:[%s590 + $0x270] sm:$0xff]
        %v832 = vld [vmem:[%s590 + $0x278] sm:$0xff]
        %v872 = vunpack.c.l.b16 %v714
        %v873 = vunpack.c.h.b16 %v714
        %v874 = vunpack.c.l.b16 %v715
        %v875 = vunpack.c.h.b16 %v715
        %v876 = vunpack.c.l.b16 %v716
        %v877 = vunpack.c.l.b16 %v717
        %v878 = vunpack.c.h.b16 %v717
        %v879 = vunpack.c.l.b16 %v718
        %v880 = vunpack.c.h.b16 %v718
        %v881 = vunpack.c.l.b16 %v719
        %v882 = vunpack.c.l.b16 %v720
        %v883 = vunpack.c.h.b16 %v720
        %v884 = vunpack.c.l.b16 %v721
        %v885 = vunpack.c.h.b16 %v721
        %v886 = vunpack.c.l.b16 %v722
        %v887 = vunpack.c.l.b16 %v723
        %v888 = vunpack.c.h.b16 %v723
        %v889 = vunpack.c.l.b16 %v724
        %v890 = vunpack.c.h.b16 %v724
        %v891 = vunpack.c.l.b16 %v725
        %v892 = vunpack.c.l.b16 %v726
        %v893 = vunpack.c.h.b16 %v726
        %v894 = vunpack.c.l.b16 %v727
        %v895 = vunpack.c.h.b16 %v727
        %v896 = vunpack.c.l.b16 %v728
        %v897 = vunpack.c.l.b16 %v729
        %v898 = vunpack.c.h.b16 %v729
        %v899 = vunpack.c.l.b16 %v730
        %v900 = vunpack.c.h.b16 %v730
        %v901 = vunpack.c.l.b16 %v731
        %v902 = vunpack.c.l.b16 %v732
        %v903 = vunpack.c.h.b16 %v732
        %v904 = vunpack.c.l.b16 %v733
        %v905 = vunpack.c.h.b16 %v733
        %v906 = vunpack.c.l.b16 %v734
        %v907 = vunpack.c.l.b16 %v735
        %v908 = vunpack.c.h.b16 %v735
        %v909 = vunpack.c.l.b16 %v736
        %v910 = vunpack.c.h.b16 %v736
        %v911 = vunpack.c.l.b16 %v737
        %v912 = vunpack.c.l.b16 %v738
        %v913 = vunpack.c.h.b16 %v738
        %v914 = vunpack.c.l.b16 %v739
        %v915 = vunpack.c.h.b16 %v739
        %v916 = vunpack.c.l.b16 %v740
        %v917 = vunpack.c.l.b16 %v741
        %v918 = vunpack.c.h.b16 %v741
        %v919 = vunpack.c.l.b16 %v742
        %v920 = vunpack.c.h.b16 %v742
        %v921 = vunpack.c.l.b16 %v743
        %v922 = vunpack.c.l.b16 %v744
        %v923 = vunpack.c.h.b16 %v744
        %v924 = vunpack.c.l.b16 %v745
        %v925 = vunpack.c.h.b16 %v745
        %v926 = vunpack.c.l.b16 %v746
        %v927 = vunpack.c.l.b16 %v747
        %v928 = vunpack.c.h.b16 %v747
        %v929 = vunpack.c.l.b16 %v748
        %v930 = vunpack.c.h.b16 %v748
        %v931 = vunpack.c.l.b16 %v749
        %v932 = vunpack.c.l.b16 %v750
        %v933 = vunpack.c.h.b16 %v750
        %v934 = vunpack.c.l.b16 %v751
        %v935 = vunpack.c.h.b16 %v751
        %v936 = vunpack.c.l.b16 %v752
        %v937 = vpack.c.b16 %v877, %v872
        %v938 = vpack.c.b16 %v878, %v873
        %v939 = vpack.c.b16 %v879, %v874
        %v940 = vpack.c.b16 %v880, %v875
        %v941 = vpack.c.b16 %v881, %v876
        %v942 = vpack.c.b16 %v887, %v882
        %v943 = vpack.c.b16 %v888, %v883
        %v944 = vpack.c.b16 %v889, %v884
        %v945 = vpack.c.b16 %v890, %v885
        %v946 = vpack.c.b16 %v891, %v886
        %v947 = vpack.c.b16 %v897, %v892
        %v948 = vpack.c.b16 %v898, %v893
        %v949 = vpack.c.b16 %v899, %v894
        %v950 = vpack.c.b16 %v900, %v895
        %v951 = vpack.c.b16 %v901, %v896
        %v952 = vpack.c.b16 %v907, %v902
        %v953 = vpack.c.b16 %v908, %v903
        %v954 = vpack.c.b16 %v909, %v904
        %v955 = vpack.c.b16 %v910, %v905
        %v956 = vpack.c.b16 %v911, %v906
        %v957 = vpack.c.b16 %v917, %v912
        %v958 = vpack.c.b16 %v918, %v913
        %v959 = vpack.c.b16 %v919, %v914
        %v960 = vpack.c.b16 %v920, %v915
        %v961 = vpack.c.b16 %v921, %v916
        %v962 = vpack.c.b16 %v927, %v922
        %v963 = vpack.c.b16 %v928, %v923
        %v964 = vpack.c.b16 %v929, %v924
        %v965 = vpack.c.b16 %v930, %v925
        %v966 = vpack.c.b16 %v931, %v926
        %v967 = vpack.c.b16 %v932, %v932
        %v968 = vpack.c.b16 %v933, %v933
        %v969 = vpack.c.b16 %v934, %v934
        %v970 = vpack.c.b16 %v935, %v935
        %v971 = vpack.c.b16 %v936, %v936
        %v1087 = vunpack.c.l.b16 %v753
        %v1088 = vunpack.c.h.b16 %v753
        %v1089 = vunpack.c.l.b16 %v754
        %v1090 = vunpack.c.h.b16 %v754
        %v1091 = vunpack.c.l.b16 %v755
        %v1092 = vunpack.c.h.b16 %v755
        %v1093 = vunpack.c.l.b16 %v756
        %v1094 = vunpack.c.h.b16 %v756
        %v1095 = vunpack.c.l.b16 %v757
        %v1096 = vunpack.c.h.b16 %v757
        %v1097 = vunpack.c.l.b16 %v758
        %v1098 = vunpack.c.h.b16 %v758
        %v1099 = vunpack.c.l.b16 %v759
        %v1100 = vunpack.c.h.b16 %v759
        %v1101 = vunpack.c.l.b16 %v760
        %v1102 = vunpack.c.h.b16 %v760
        %v1103 = vunpack.c.l.b16 %v761
        %v1104 = vunpack.c.h.b16 %v761
        %v1105 = vunpack.c.l.b16 %v762
        %v1106 = vunpack.c.h.b16 %v762
        %v1107 = vunpack.c.l.b16 %v763
        %v1108 = vunpack.c.h.b16 %v763
        %v1109 = vunpack.c.l.b16 %v764
        %v1110 = vunpack.c.h.b16 %v764
        %v1111 = vunpack.c.l.b16 %v765
        %v1112 = vunpack.c.h.b16 %v765
        %v1113 = vunpack.c.l.b16 %v766
        %v1114 = vunpack.c.h.b16 %v766
        %v1115 = vunpack.c.l.b16 %v767
        %v1116 = vunpack.c.h.b16 %v767
        %v1117 = vunpack.c.l.b16 %v768
        %v1118 = vunpack.c.h.b16 %v768
        %v1119 = vunpack.c.l.b16 %v769
        %v1120 = vunpack.c.h.b16 %v769
        %v1121 = vunpack.c.l.b16 %v770
        %v1122 = vunpack.c.h.b16 %v770
        %v1123 = vunpack.c.l.b16 %v771
        %v1124 = vunpack.c.h.b16 %v771
        %v1125 = vunpack.c.l.b16 %v772
        %v1126 = vunpack.c.h.b16 %v772
        %v1127 = vunpack.c.l.b16 %v773
        %v1128 = vunpack.c.h.b16 %v773
        %v1129 = vunpack.c.l.b16 %v774
        %v1130 = vunpack.c.h.b16 %v774
        %v1131 = vunpack.c.l.b16 %v775
        %v1132 = vunpack.c.h.b16 %v775
        %v1133 = vunpack.c.l.b16 %v776
        %v1134 = vunpack.c.h.b16 %v776
        %v1135 = vunpack.c.l.b16 %v777
        %v1136 = vunpack.c.h.b16 %v777
        %v1137 = vunpack.c.l.b16 %v778
        %v1138 = vunpack.c.h.b16 %v778
        %v1139 = vunpack.c.l.b16 %v779
        %v1140 = vunpack.c.h.b16 %v779
        %v1141 = vunpack.c.l.b16 %v780
        %v1142 = vunpack.c.h.b16 %v780
        %v1143 = vunpack.c.l.b16 %v781
        %v1144 = vunpack.c.h.b16 %v781
        %v1145 = vunpack.c.l.b16 %v782
        %v1146 = vunpack.c.h.b16 %v782
        %v1147 = vunpack.c.l.b16 %v783
        %v1148 = vunpack.c.h.b16 %v783
        %v1149 = vunpack.c.l.b16 %v784
        %v1150 = vunpack.c.h.b16 %v784
        %v1151 = vunpack.c.l.b16 %v785
        %v1152 = vunpack.c.h.b16 %v785
        %v1153 = vunpack.c.l.b16 %v786
        %v1154 = vunpack.c.h.b16 %v786
        %v1155 = vunpack.c.l.b16 %v787
        %v1156 = vunpack.c.h.b16 %v787
        %v1157 = vunpack.c.l.b16 %v788
        %v1158 = vunpack.c.h.b16 %v788
        %v1159 = vunpack.c.l.b16 %v789
        %v1160 = vunpack.c.h.b16 %v789
        %v1161 = vunpack.c.l.b16 %v790
        %v1162 = vunpack.c.h.b16 %v790
        %v1163 = vunpack.c.l.b16 %v791
        %v1164 = vunpack.c.h.b16 %v791
        %v1165 = vunpack.c.l.b16 %v792
        %v1166 = vunpack.c.h.b16 %v792
        %v1167 = vunpack.c.l.b16 %v793
        %v1168 = vunpack.c.h.b16 %v793
        %v1169 = vunpack.c.l.b16 %v794
        %v1170 = vunpack.c.h.b16 %v794
        %v1171 = vunpack.c.l.b16 %v795
        %v1172 = vunpack.c.h.b16 %v795
        %v1173 = vunpack.c.l.b16 %v796
        %v1174 = vunpack.c.h.b16 %v796
        %v1175 = vunpack.c.l.b16 %v797
        %v1176 = vunpack.c.h.b16 %v797
        %v1177 = vunpack.c.l.b16 %v798
        %v1178 = vunpack.c.h.b16 %v798
        %v1179 = vunpack.c.l.b16 %v799
        %v1180 = vunpack.c.h.b16 %v799
        %v1181 = vunpack.c.l.b16 %v800
        %v1182 = vunpack.c.h.b16 %v800
        %v1183 = vunpack.c.l.b16 %v801
        %v1184 = vunpack.c.h.b16 %v801
        %v1185 = vunpack.c.l.b16 %v802
        %v1186 = vunpack.c.h.b16 %v802
        %v1187 = vunpack.c.l.b16 %v803
        %v1188 = vunpack.c.h.b16 %v803
        %v1189 = vunpack.c.l.b16 %v804
        %v1190 = vunpack.c.h.b16 %v804
        %v1191 = vunpack.c.l.b16 %v805
        %v1192 = vunpack.c.h.b16 %v805
        %v1193 = vunpack.c.l.b16 %v806
        %v1194 = vunpack.c.h.b16 %v806
        %v1195 = vunpack.c.l.b16 %v807
        %v1196 = vunpack.c.h.b16 %v807
        %v1197 = vunpack.c.l.b16 %v808
        %v1198 = vunpack.c.h.b16 %v808
        %v1199 = vunpack.c.l.b16 %v809
        %v1200 = vunpack.c.h.b16 %v809
        %v1201 = vunpack.c.l.b16 %v810
        %v1202 = vunpack.c.h.b16 %v810
        %v1203 = vunpack.c.l.b16 %v811
        %v1204 = vunpack.c.h.b16 %v811
        %v1205 = vunpack.c.l.b16 %v812
        %v1206 = vunpack.c.h.b16 %v812
        %v1207 = vunpack.c.l.b16 %v813
        %v1208 = vunpack.c.h.b16 %v813
        %v1209 = vunpack.c.l.b16 %v814
        %v1210 = vunpack.c.h.b16 %v814
        %v1211 = vunpack.c.l.b16 %v815
        %v1212 = vunpack.c.h.b16 %v815
        %v1213 = vunpack.c.l.b16 %v816
        %v1214 = vunpack.c.h.b16 %v816
        %v1215 = vunpack.c.l.b16 %v817
        %v1216 = vunpack.c.h.b16 %v817
        %v1217 = vunpack.c.l.b16 %v818
        %v1218 = vunpack.c.h.b16 %v818
        %v1219 = vunpack.c.l.b16 %v819
        %v1220 = vunpack.c.h.b16 %v819
        %v1221 = vunpack.c.l.b16 %v820
        %v1222 = vunpack.c.h.b16 %v820
        %v1223 = vunpack.c.l.b16 %v821
        %v1224 = vunpack.c.h.b16 %v821
        %v1225 = vunpack.c.l.b16 %v822
        %v1226 = vunpack.c.h.b16 %v822
        %v1227 = vunpack.c.l.b16 %v823
        %v1228 = vunpack.c.h.b16 %v823
        %v1229 = vunpack.c.l.b16 %v824
        %v1230 = vunpack.c.h.b16 %v824
        %v1231 = vunpack.c.l.b16 %v825
        %v1232 = vunpack.c.h.b16 %v825
        %v1233 = vunpack.c.l.b16 %v826
        %v1234 = vunpack.c.h.b16 %v826
        %v1235 = vunpack.c.l.b16 %v827
        %v1236 = vunpack.c.h.b16 %v827
        %v1237 = vunpack.c.l.b16 %v828
        %v1238 = vunpack.c.h.b16 %v828
        %v1239 = vunpack.c.l.b16 %v829
        %v1240 = vunpack.c.h.b16 %v829
        %v1241 = vunpack.c.l.b16 %v830
        %v1242 = vunpack.c.h.b16 %v830
        %v1243 = vunpack.c.l.b16 %v831
        %v1244 = vunpack.c.h.b16 %v831
        %v1245 = vunpack.c.l.b16 %v832
        %v1246 = vunpack.c.h.b16 %v832
        %v1247 = vpack.c.b16 %v1089, %v1087
        %v1248 = vpack.c.b16 %v1090, %v1088
        %v1249 = vpack.c.b16 %v1093, %v1091
        %v1250 = vpack.c.b16 %v1094, %v1092
        %v1251 = vpack.c.b16 %v1097, %v1095
        %v1252 = vpack.c.b16 %v1098, %v1096
        %v1253 = vpack.c.b16 %v1101, %v1099
        %v1254 = vpack.c.b16 %v1102, %v1100
        %v1255 = vpack.c.b16 %v1105, %v1103
        %v1256 = vpack.c.b16 %v1106, %v1104
        %v1257 = vpack.c.b16 %v1109, %v1107
        %v1258 = vpack.c.b16 %v1110, %v1108
        %v1259 = vpack.c.b16 %v1113, %v1111
        %v1260 = vpack.c.b16 %v1114, %v1112
        %v1261 = vpack.c.b16 %v1117, %v1115
        %v1262 = vpack.c.b16 %v1118, %v1116
        %v1263 = vpack.c.b16 %v1121, %v1119
        %v1264 = vpack.c.b16 %v1122, %v1120
        %v1265 = vpack.c.b16 %v1125, %v1123
        %v1266 = vpack.c.b16 %v1126, %v1124
        %v1267 = vpack.c.b16 %v1129, %v1127
        %v1268 = vpack.c.b16 %v1130, %v1128
        %v1269 = vpack.c.b16 %v1133, %v1131
        %v1270 = vpack.c.b16 %v1134, %v1132
        %v1271 = vpack.c.b16 %v1137, %v1135
        %v1272 = vpack.c.b16 %v1138, %v1136
        %v1273 = vpack.c.b16 %v1141, %v1139
        %v1274 = vpack.c.b16 %v1142, %v1140
        %v1275 = vpack.c.b16 %v1145, %v1143
        %v1276 = vpack.c.b16 %v1146, %v1144
        %v1277 = vpack.c.b16 %v1149, %v1147
        %v1278 = vpack.c.b16 %v1150, %v1148
        %v1279 = vpack.c.b16 %v1153, %v1151
        %v1280 = vpack.c.b16 %v1154, %v1152
        %v1281 = vpack.c.b16 %v1157, %v1155
        %v1282 = vpack.c.b16 %v1158, %v1156
        %v1283 = vpack.c.b16 %v1161, %v1159
        %v1284 = vpack.c.b16 %v1162, %v1160
        %v1285 = vpack.c.b16 %v1165, %v1163
        %v1286 = vpack.c.b16 %v1166, %v1164
        %v1287 = vpack.c.b16 %v1169, %v1167
        %v1288 = vpack.c.b16 %v1170, %v1168
        %v1289 = vpack.c.b16 %v1173, %v1171
        %v1290 = vpack.c.b16 %v1174, %v1172
        %v1291 = vpack.c.b16 %v1177, %v1175
        %v1292 = vpack.c.b16 %v1178, %v1176
        %v1293 = vpack.c.b16 %v1181, %v1179
        %v1294 = vpack.c.b16 %v1182, %v1180
        %v1295 = vpack.c.b16 %v1185, %v1183
        %v1296 = vpack.c.b16 %v1186, %v1184
        %v1297 = vpack.c.b16 %v1189, %v1187
        %v1298 = vpack.c.b16 %v1190, %v1188
        %v1299 = vpack.c.b16 %v1193, %v1191
        %v1300 = vpack.c.b16 %v1194, %v1192
        %v1301 = vpack.c.b16 %v1197, %v1195
        %v1302 = vpack.c.b16 %v1198, %v1196
        %v1303 = vpack.c.b16 %v1201, %v1199
        %v1304 = vpack.c.b16 %v1202, %v1200
        %v1305 = vpack.c.b16 %v1205, %v1203
        %v1306 = vpack.c.b16 %v1206, %v1204
        %v1307 = vpack.c.b16 %v1209, %v1207
        %v1308 = vpack.c.b16 %v1210, %v1208
        %v1309 = vpack.c.b16 %v1213, %v1211
        %v1310 = vpack.c.b16 %v1214, %v1212
        %v1311 = vpack.c.b16 %v1217, %v1215
        %v1312 = vpack.c.b16 %v1218, %v1216
        %v1313 = vpack.c.b16 %v1221, %v1219
        %v1314 = vpack.c.b16 %v1222, %v1220
        %v1315 = vpack.c.b16 %v1225, %v1223
        %v1316 = vpack.c.b16 %v1226, %v1224
        %v1317 = vpack.c.b16 %v1229, %v1227
        %v1318 = vpack.c.b16 %v1230, %v1228
        %v1319 = vpack.c.b16 %v1233, %v1231
        %v1320 = vpack.c.b16 %v1234, %v1232
        %v1321 = vpack.c.b16 %v1237, %v1235
        %v1322 = vpack.c.b16 %v1238, %v1236
        %v1323 = vpack.c.b16 %v1241, %v1239
        %v1324 = vpack.c.b16 %v1242, %v1240
        %v1325 = vpack.c.b16 %v1245, %v1243
        %v1326 = vpack.c.b16 %v1246, %v1244
        %1407 = vmatprep.subr.bf16.mxu0 %v1262
        %1408 = vmatpush1.bf16.msra.mxu0 %v1261
        %1409 = vmatprep.subr.bf16.mxu0 %v1260
        %1410 = vmatpush1.bf16.msra.mxu0 %v1259
        %1411 = vmatprep.subr.bf16.mxu0 %v1258
        %1412 = vmatpush1.bf16.msra.mxu0 %v1257
        %1413 = vmatprep.subr.bf16.mxu0 %v1256
        %1414 = vmatpush1.bf16.msra.mxu0 %v1255
        %1415 = vmatprep.subr.bf16.mxu0 %v1254
        %1416 = vmatpush1.bf16.msra.mxu0 %v1253
        %1417 = vmatprep.subr.bf16.mxu0 %v1252
        %1418 = vmatpush1.bf16.msra.mxu0 %v1251
        %1419 = vmatprep.subr.bf16.mxu0 %v1250
        %1420 = vmatpush1.bf16.msra.mxu0 %v1249
        %1421 = vmatprep.subr.bf16.mxu0 %v1248
        %1422 = vmatpush1.bf16.msra.mxu0 %v1247
        %1423 = vmatprep.subr.bf16.mxu0 %v1278
        %1424 = vmatpush2.bf16.msra.mxu0 %v1277
        %1425 = vmatprep.subr.bf16.mxu0 %v1276
        %1426 = vmatpush2.bf16.msra.mxu0 %v1275
        %1427 = vmatprep.subr.bf16.mxu0 %v1274
        %1428 = vmatpush2.bf16.msra.mxu0 %v1273
        %1429 = vmatprep.subr.bf16.mxu0 %v1272
        %1430 = vmatpush2.bf16.msra.mxu0 %v1271
        %1431 = vmatprep.subr.bf16.mxu0 %v1270
        %1432 = vmatpush2.bf16.msra.mxu0 %v1269
        %1433 = vmatprep.subr.bf16.mxu0 %v1268
        %1434 = vmatpush2.bf16.msra.mxu0 %v1267
        %1435 = vmatprep.subr.bf16.mxu0 %v1266
        %1436 = vmatpush2.bf16.msra.mxu0 %v1265
        %1437 = vmatprep.subr.bf16.mxu0 %v1264
        %1438 = vmatpush2.bf16.msra.mxu0 %v1263
        %1439 = vmatprep.mubr.bf16.mxu0 %v938
        %1440 = vmatmul.mubr.bf16.gmra.mxu0 %v937
        %v1441 = vpop.f32.mrf.mxu0
        %v1442 = vadd.f32 0.0, %v1441
        %v1443 = vpop.f32.mrf.mxu0
        %v1444 = vadd.f32 0.0, %v1443
        %v1445 = vpop.f32.mrf.mxu0
        %v1446 = vadd.f32 0.0, %v1445
        %v1447 = vpop.f32.mrf.mxu0
        %v1448 = vadd.f32 0.0, %v1447
        %1449 = vmatprep.mubr.bf16.mxu0 %v943
        %1450 = vmatmul.mubr.bf16.gmra.mxu0 %v942
        %v1451 = vpop.f32.mrf.mxu0
        %v1452 = vadd.f32 0.0, %v1451
        %v1453 = vpop.f32.mrf.mxu0
        %v1454 = vadd.f32 0.0, %v1453
        %v1455 = vpop.f32.mrf.mxu0
        %v1456 = vadd.f32 0.0, %v1455
        %v1457 = vpop.f32.mrf.mxu0
        %v1458 = vadd.f32 0.0, %v1457
        %1459 = vmatprep.mubr.bf16.mxu0 %v948
        %1460 = vmatmul.mubr.bf16.gmra.mxu0 %v947
        %v1461 = vpop.f32.mrf.mxu0
        %v1462 = vadd.f32 0.0, %v1461
        %v1463 = vpop.f32.mrf.mxu0
        %v1464 = vadd.f32 0.0, %v1463
        %v1465 = vpop.f32.mrf.mxu0
        %v1466 = vadd.f32 0.0, %v1465
        %v1467 = vpop.f32.mrf.mxu0
        %v1468 = vadd.f32 0.0, %v1467
        %1469 = vmatprep.mubr.bf16.mxu0 %v953
        %1470 = vmatmul.mubr.bf16.gmra.mxu0 %v952
        %v1471 = vpop.f32.mrf.mxu0
        %v1472 = vadd.f32 0.0, %v1471
        %v1473 = vpop.f32.mrf.mxu0
        %v1474 = vadd.f32 0.0, %v1473
        %v1475 = vpop.f32.mrf.mxu0
        %v1476 = vadd.f32 0.0, %v1475
        %v1477 = vpop.f32.mrf.mxu0
        %v1478 = vadd.f32 0.0, %v1477
        %1479 = vmatprep.mubr.bf16.mxu0 %v958
        %1480 = vmatmul.mubr.bf16.gmra.mxu0 %v957
        %v1481 = vpop.f32.mrf.mxu0
        %v1482 = vadd.f32 0.0, %v1481
        %v1483 = vpop.f32.mrf.mxu0
        %v1484 = vadd.f32 0.0, %v1483
        %v1485 = vpop.f32.mrf.mxu0
        %v1486 = vadd.f32 0.0, %v1485
        %v1487 = vpop.f32.mrf.mxu0
        %v1488 = vadd.f32 0.0, %v1487
        %1489 = vmatprep.mubr.bf16.mxu0 %v963
        %1490 = vmatmul.mubr.bf16.gmra.mxu0 %v962
        %v1491 = vpop.f32.mrf.mxu0
        %v1492 = vadd.f32 0.0, %v1491
        %v1493 = vpop.f32.mrf.mxu0
        %v1494 = vadd.f32 0.0, %v1493
        %v1495 = vpop.f32.mrf.mxu0
        %v1496 = vadd.f32 0.0, %v1495
        %v1497 = vpop.f32.mrf.mxu0
        %v1498 = vadd.f32 0.0, %v1497
        %1499 = vmatprep.mubr.bf16.mxu0 %v968
        %1500 = vmatmul.mubr.bf16.gmra.mxu0 %v967
        %v1501 = vpop.f32.mrf.mxu0
        %v1502 = vadd.f32 0.0, %v1501
        %v1503 = vpop.f32.mrf.mxu0
        %v1504 = vadd.f32 0.0, %v1503
        %v1505 = vpop.f32.mrf.mxu0
        %v1506 = vpop.f32.mrf.mxu0
        %1507 = vdwg.mxu0
        %1508 = vmatprep.subr.bf16.mxu0 %v1294
        %1509 = vmatpush1.bf16.msra.mxu0 %v1293
        %1510 = vmatprep.subr.bf16.mxu0 %v1292
        %1511 = vmatpush1.bf16.msra.mxu0 %v1291
        %1512 = vmatprep.subr.bf16.mxu0 %v1290
        %1513 = vmatpush1.bf16.msra.mxu0 %v1289
        %1514 = vmatprep.subr.bf16.mxu0 %v1288
        %1515 = vmatpush1.bf16.msra.mxu0 %v1287
        %1516 = vmatprep.subr.bf16.mxu0 %v1286
        %1517 = vmatpush1.bf16.msra.mxu0 %v1285
        %1518 = vmatprep.subr.bf16.mxu0 %v1284
        %1519 = vmatpush1.bf16.msra.mxu0 %v1283
        %1520 = vmatprep.subr.bf16.mxu0 %v1282
        %1521 = vmatpush1.bf16.msra.mxu0 %v1281
        %1522 = vmatprep.subr.bf16.mxu0 %v1280
        %1523 = vmatpush1.bf16.msra.mxu0 %v1279
        %1524 = vmatprep.subr.bf16.mxu0 %v1310
        %1525 = vmatpush2.bf16.msra.mxu0 %v1309
        %1526 = vmatprep.subr.bf16.mxu0 %v1308
        %1527 = vmatpush2.bf16.msra.mxu0 %v1307
        %1528 = vmatprep.subr.bf16.mxu0 %v1306
        %1529 = vmatpush2.bf16.msra.mxu0 %v1305
        %1530 = vmatprep.subr.bf16.mxu0 %v1304
        %1531 = vmatpush2.bf16.msra.mxu0 %v1303
        %1532 = vmatprep.subr.bf16.mxu0 %v1302
        %1533 = vmatpush2.bf16.msra.mxu0 %v1301
        %1534 = vmatprep.subr.bf16.mxu0 %v1300
        %1535 = vmatpush2.bf16.msra.mxu0 %v1299
        %1536 = vmatprep.subr.bf16.mxu0 %v1298
        %1537 = vmatpush2.bf16.msra.mxu0 %v1297
        %1538 = vmatprep.subr.bf16.mxu0 %v1296
        %1539 = vmatpush2.bf16.msra.mxu0 %v1295
        %1540 = vmatprep.mubr.bf16.mxu0 %v940
        %1541 = vmatmul.mubr.bf16.gmra.mxu0 %v939
        %v1542 = vpop.f32.mrf.mxu0
        %v1543 = vadd.f32 %v1442, %v1542
        %v1544 = vpop.f32.mrf.mxu0
        %v1545 = vadd.f32 %v1444, %v1544
        %v1546 = vpop.f32.mrf.mxu0
        %v1547 = vadd.f32 %v1446, %v1546
        %v1548 = vpop.f32.mrf.mxu0
        %v1549 = vadd.f32 %v1448, %v1548
        %1550 = vmatprep.mubr.bf16.mxu0 %v945
        %1551 = vmatmul.mubr.bf16.gmra.mxu0 %v944
        %v1552 = vpop.f32.mrf.mxu0
        %v1553 = vadd.f32 %v1452, %v1552
        %v1554 = vpop.f32.mrf.mxu0
        %v1555 = vadd.f32 %v1454, %v1554
        %v1556 = vpop.f32.mrf.mxu0
        %v1557 = vadd.f32 %v1456, %v1556
        %v1558 = vpop.f32.mrf.mxu0
        %v1559 = vadd.f32 %v1458, %v1558
        %1560 = vmatprep.mubr.bf16.mxu0 %v950
        %1561 = vmatmul.mubr.bf16.gmra.mxu0 %v949
        %v1562 = vpop.f32.mrf.mxu0
        %v1563 = vadd.f32 %v1462, %v1562
        %v1564 = vpop.f32.mrf.mxu0
        %v1565 = vadd.f32 %v1464, %v1564
        %v1566 = vpop.f32.mrf.mxu0
        %v1567 = vadd.f32 %v1466, %v1566
        %v1568 = vpop.f32.mrf.mxu0
        %v1569 = vadd.f32 %v1468, %v1568
        %1570 = vmatprep.mubr.bf16.mxu0 %v955
        %1571 = vmatmul.mubr.bf16.gmra.mxu0 %v954
        %v1572 = vpop.f32.mrf.mxu0
        %v1573 = vadd.f32 %v1472, %v1572
        %v1574 = vpop.f32.mrf.mxu0
        %v1575 = vadd.f32 %v1474, %v1574
        %v1576 = vpop.f32.mrf.mxu0
        %v1577 = vadd.f32 %v1476, %v1576
        %v1578 = vpop.f32.mrf.mxu0
        %v1579 = vadd.f32 %v1478, %v1578
        %1580 = vmatprep.mubr.bf16.mxu0 %v960
        %1581 = vmatmul.mubr.bf16.gmra.mxu0 %v959
        %v1582 = vpop.f32.mrf.mxu0
        %v1583 = vadd.f32 %v1482, %v1582
        %v1584 = vpop.f32.mrf.mxu0
        %v1585 = vadd.f32 %v1484, %v1584
        %v1586 = vpop.f32.mrf.mxu0
        %v1587 = vadd.f32 %v1486, %v1586
        %v1588 = vpop.f32.mrf.mxu0
        %v1589 = vadd.f32 %v1488, %v1588
        %1590 = vmatprep.mubr.bf16.mxu0 %v965
        %1591 = vmatmul.mubr.bf16.gmra.mxu0 %v964
        %v1592 = vpop.f32.mrf.mxu0
        %v1593 = vadd.f32 %v1492, %v1592
        %v1594 = vpop.f32.mrf.mxu0
        %v1595 = vadd.f32 %v1494, %v1594
        %v1596 = vpop.f32.mrf.mxu0
        %v1597 = vadd.f32 %v1496, %v1596
        %v1598 = vpop.f32.mrf.mxu0
        %v1599 = vadd.f32 %v1498, %v1598
        %1600 = vmatprep.mubr.bf16.mxu0 %v970
        %1601 = vmatmul.mubr.bf16.gmra.mxu0 %v969
        %v1602 = vpop.f32.mrf.mxu0
        %v1603 = vadd.f32 %v1502, %v1602
        %v1604 = vpop.f32.mrf.mxu0
        %v1605 = vadd.f32 %v1504, %v1604
        %v1606 = vpop.f32.mrf.mxu0
        %v1607 = vpop.f32.mrf.mxu0
        %1608 = vdwg.mxu0
        %1609 = vmatprep.subr.bf16.mxu0 %v1326
        %1610 = vmatpush1.bf16.msra.mxu0 %v1325
        %1611 = vmatprep.subr.bf16.mxu0 %v1324
        %1612 = vmatpush1.bf16.msra.mxu0 %v1323
        %1613 = vmatprep.subr.bf16.mxu0 %v1322
        %1614 = vmatpush1.bf16.msra.mxu0 %v1321
        %1615 = vmatprep.subr.bf16.mxu0 %v1320
        %1616 = vmatpush1.bf16.msra.mxu0 %v1319
        %1617 = vmatprep.subr.bf16.mxu0 %v1318
        %1618 = vmatpush1.bf16.msra.mxu0 %v1317
        %1619 = vmatprep.subr.bf16.mxu0 %v1316
        %1620 = vmatpush1.bf16.msra.mxu0 %v1315
        %1621 = vmatprep.subr.bf16.mxu0 %v1314
        %1622 = vmatpush1.bf16.msra.mxu0 %v1313
        %1623 = vmatprep.subr.bf16.mxu0 %v1312
        %1624 = vmatpush1.bf16.msra.mxu0 %v1311
        %1625 = vmatprep.subr.bf16.mxu0 0
        %1626 = vmatpush2.bf16.msra.mxu0 0
        %1627 = vmatprep.subr.bf16.mxu0 0
        %1628 = vmatpush2.bf16.msra.mxu0 0
        %1629 = vmatprep.subr.bf16.mxu0 0
        %1630 = vmatpush2.bf16.msra.mxu0 0
        %1631 = vmatprep.subr.bf16.mxu0 0
        %1632 = vmatpush2.bf16.msra.mxu0 0
        %1633 = vmatprep.subr.bf16.mxu0 0
        %1634 = vmatpush2.bf16.msra.mxu0 0
        %1635 = vmatprep.subr.bf16.mxu0 0
        %1636 = vmatpush2.bf16.msra.mxu0 0
        %1637 = vmatprep.subr.bf16.mxu0 0
        %1638 = vmatpush2.bf16.msra.mxu0 0
        %1639 = vmatprep.subr.bf16.mxu0 0
        %1640 = vmatpush2.bf16.msra.mxu0 0
        %1641 = vmatprep.mubr.bf16.mxu0 0
        %1642 = vmatmul.mubr.bf16.gmra.mxu0 %v941
        %v1643 = vpop.f32.mrf.mxu0
        %v1644 = vadd.f32 %v1543, %v1643
        %v1645 = vpop.f32.mrf.mxu0
        %v1646 = vadd.f32 %v1545, %v1645
        %v1647 = vpop.f32.mrf.mxu0
        %v1648 = vadd.f32 %v1547, %v1647
        %v1649 = vpop.f32.mrf.mxu0
        %v1650 = vadd.f32 %v1549, %v1649
        %1651 = vmatprep.mubr.bf16.mxu0 0
        %1652 = vmatmul.mubr.bf16.gmra.mxu0 %v946
        %v1653 = vpop.f32.mrf.mxu0
        %v1654 = vadd.f32 %v1553, %v1653
        %v1655 = vpop.f32.mrf.mxu0
        %v1656 = vadd.f32 %v1555, %v1655
        %v1657 = vpop.f32.mrf.mxu0
        %v1658 = vadd.f32 %v1557, %v1657
        %v1659 = vpop.f32.mrf.mxu0
        %v1660 = vadd.f32 %v1559, %v1659
        %1661 = vmatprep.mubr.bf16.mxu0 0
        %1662 = vmatmul.mubr.bf16.gmra.mxu0 %v951
        %v1663 = vpop.f32.mrf.mxu0
        %v1664 = vadd.f32 %v1563, %v1663
        %v1665 = vpop.f32.mrf.mxu0
        %v1666 = vadd.f32 %v1565, %v1665
        %v1667 = vpop.f32.mrf.mxu0
        %v1668 = vadd.f32 %v1567, %v1667
        %v1669 = vpop.f32.mrf.mxu0
        %v1670 = vadd.f32 %v1569, %v1669
        %1671 = vmatprep.mubr.bf16.mxu0 0
        %1672 = vmatmul.mubr.bf16.gmra.mxu0 %v956
        %v1673 = vpop.f32.mrf.mxu0
        %v1674 = vadd.f32 %v1573, %v1673
        %v1675 = vpop.f32.mrf.mxu0
        %v1676 = vadd.f32 %v1575, %v1675
        %v1677 = vpop.f32.mrf.mxu0
        %v1678 = vadd.f32 %v1577, %v1677
        %v1679 = vpop.f32.mrf.mxu0
        %v1680 = vadd.f32 %v1579, %v1679
        %1681 = vmatprep.mubr.bf16.mxu0 0
        %1682 = vmatmul.mubr.bf16.gmra.mxu0 %v961
        %v1683 = vpop.f32.mrf.mxu0
        %v1684 = vadd.f32 %v1583, %v1683
        %v1685 = vpop.f32.mrf.mxu0
        %v1686 = vadd.f32 %v1585, %v1685
        %v1687 = vpop.f32.mrf.mxu0
        %v1688 = vadd.f32 %v1587, %v1687
        %v1689 = vpop.f32.mrf.mxu0
        %v1690 = vadd.f32 %v1589, %v1689
        %1691 = vmatprep.mubr.bf16.mxu0 0
        %1692 = vmatmul.mubr.bf16.gmra.mxu0 %v966
        %v1693 = vpop.f32.mrf.mxu0
        %v1694 = vadd.f32 %v1593, %v1693
        %v1695 = vpop.f32.mrf.mxu0
        %v1696 = vadd.f32 %v1595, %v1695
        %v1697 = vpop.f32.mrf.mxu0
        %v1698 = vadd.f32 %v1597, %v1697
        %v1699 = vpop.f32.mrf.mxu0
        %v1700 = vadd.f32 %v1599, %v1699
        %1701 = vmatprep.mubr.bf16.mxu0 0
        %1702 = vmatmul.mubr.bf16.gmra.mxu0 %v971
        %v1703 = vpop.f32.mrf.mxu0
        %v1704 = vadd.f32 %v1603, %v1703
        %v1705 = vpop.f32.mrf.mxu0
        %v1706 = vadd.f32 %v1605, %v1705
        %v1707 = vpop.f32.mrf.mxu0
        %v1708 = vpop.f32.mrf.mxu0
        %1709 = vdwg.mxu0
        %v1710 = vadd.f32 %v688, %v1644
        %v1711 = vadd.f32 %v689, %v1646
        %v1712 = vadd.f32 %v690, %v1648
        %v1713 = vadd.f32 %v691, %v1650
        %v1714 = vadd.f32 %v692, %v1654
        %v1715 = vadd.f32 %v693, %v1656
        %v1716 = vadd.f32 %v694, %v1658
        %v1717 = vadd.f32 %v695, %v1660
        %v1718 = vadd.f32 %v696, %v1664
        %v1719 = vadd.f32 %v697, %v1666
        %v1720 = vadd.f32 %v698, %v1668
        %v1721 = vadd.f32 %v699, %v1670
        %v1722 = vadd.f32 %v700, %v1674
        %v1723 = vadd.f32 %v701, %v1676
        %v1724 = vadd.f32 %v702, %v1678
        %v1725 = vadd.f32 %v703, %v1680
        %v1726 = vadd.f32 %v704, %v1684
        %v1727 = vadd.f32 %v705, %v1686
        %v1728 = vadd.f32 %v706, %v1688
        %v1729 = vadd.f32 %v707, %v1690
        %v1730 = vadd.f32 %v708, %v1694
        %v1731 = vadd.f32 %v709, %v1696
        %v1732 = vadd.f32 %v710, %v1698
        %v1733 = vadd.f32 %v711, %v1700
        %v1734 = vadd.f32 %v712, %v1704
        %v1735 = vadd.f32 %v713, %v1706
        %1736 = vst [vmem:[#allocation2] sm:$0xff] %v1710
        %1737 = vst [vmem:[#allocation2 + $0x8] sm:$0xff] %v1711
        %1738 = vst [vmem:[#allocation2 + $0x10] sm:$0xff] %v1712
        %1739 = vst [vmem:[#allocation2 + $0x18] sm:$0xff] %v1713
        %1740 = vst [vmem:[#allocation2 + $0x20] sm:$0xff] %v1714
        %1741 = vst [vmem:[#allocation2 + $0x28] sm:$0xff] %v1715
        %1742 = vst [vmem:[#allocation2 + $0x30] sm:$0xff] %v1716
        %1743 = vst [vmem:[#allocation2 + $0x38] sm:$0xff] %v1717
        %1744 = vst [vmem:[#allocation2 + $0x40] sm:$0xff] %v1718
        %1745 = vst [vmem:[#allocation2 + $0x48] sm:$0xff] %v1719
        %1746 = vst [vmem:[#allocation2 + $0x50] sm:$0xff] %v1720
        %1747 = vst [vmem:[#allocation2 + $0x58] sm:$0xff] %v1721
        %1748 = vst [vmem:[#allocation2 + $0x60] sm:$0xff] %v1722
        %1749 = vst [vmem:[#allocation2 + $0x68] sm:$0xff] %v1723
        %1750 = vst [vmem:[#allocation2 + $0x70] sm:$0xff] %v1724
        %1751 = vst [vmem:[#allocation2 + $0x78] sm:$0xff] %v1725
        %1752 = vst [vmem:[#allocation2 + $0x80] sm:$0xff] %v1726
        %1753 = vst [vmem:[#allocation2 + $0x88] sm:$0xff] %v1727
        %1754 = vst [vmem:[#allocation2 + $0x90] sm:$0xff] %v1728
        %1755 = vst [vmem:[#allocation2 + $0x98] sm:$0xff] %v1729
        %1756 = vst [vmem:[#allocation2 + $0xa0] sm:$0xff] %v1730
        %1757 = vst [vmem:[#allocation2 + $0xa8] sm:$0xff] %v1731
        %1758 = vst [vmem:[#allocation2 + $0xb0] sm:$0xff] %v1732
        %1759 = vst [vmem:[#allocation2 + $0xb8] sm:$0xff] %v1733
        %1760 = vst [vmem:[#allocation2 + $0xc0] sm:$0xff] %v1734
        %1761 = vst [vmem:[#allocation2 + $0xc8] sm:$0xff] %v1735
        // Predicated region
        $region79: #{_pallas_matmul_affine.1} parent=69 // pred_check
          %p1762 = pneg %p658
        $region80: #{_pallas_matmul_affine.1} parent=69 // pred_check_branch
          %1764 = sbr.rel (%p1762) target = $region82
        $region81: #{_pallas_matmul_affine.1} parent=69 // pred_region
          %v1765 = vld [vmem:[#allocation2] sm:$0xff]
          %v1766 = vld [vmem:[#allocation2 + $0x8] sm:$0xff]
          %v1767 = vld [vmem:[#allocation2 + $0x10] sm:$0xff]
          %v1768 = vld [vmem:[#allocation2 + $0x18] sm:$0xff]
          %v1769 = vld [vmem:[#allocation2 + $0x20] sm:$0xff]
          %v1770 = vld [vmem:[#allocation2 + $0x28] sm:$0xff]
          %v1771 = vld [vmem:[#allocation2 + $0x30] sm:$0xff]
          %v1772 = vld [vmem:[#allocation2 + $0x38] sm:$0xff]
          %v1773 = vld [vmem:[#allocation2 + $0x40] sm:$0xff]
          %v1774 = vld [vmem:[#allocation2 + $0x48] sm:$0xff]
          %v1775 = vld [vmem:[#allocation2 + $0x50] sm:$0xff]
          %v1776 = vld [vmem:[#allocation2 + $0x58] sm:$0xff]
          %v1777 = vld [vmem:[#allocation2 + $0x60] sm:$0xff]
          %v1778 = vld [vmem:[#allocation2 + $0x68] sm:$0xff]
          %v1779 = vld [vmem:[#allocation2 + $0x70] sm:$0xff]
          %v1780 = vld [vmem:[#allocation2 + $0x78] sm:$0xff]
          %v1781 = vld [vmem:[#allocation2 + $0x80] sm:$0xff]
          %v1782 = vld [vmem:[#allocation2 + $0x88] sm:$0xff]
          %v1783 = vld [vmem:[#allocation2 + $0x90] sm:$0xff]
          %v1784 = vld [vmem:[#allocation2 + $0x98] sm:$0xff]
          %v1785 = vld [vmem:[#allocation2 + $0xa0] sm:$0xff]
          %v1786 = vld [vmem:[#allocation2 + $0xa8] sm:$0xff]
          %v1787 = vld [vmem:[#allocation2 + $0xb0] sm:$0xff]
          %v1788 = vld [vmem:[#allocation2 + $0xb8] sm:$0xff]
          %v1789 = vld [vmem:[#allocation2 + $0xc0] sm:$0xff]
          %v1790 = vld [vmem:[#allocation2 + $0xc8] sm:$0xff]
          %v1791 = vld [vmem:[%s648] sm:$0x3]
          %v1793 = vlaneseq
          %v1794 = vshrl.u32 %v1793, 7
          %v1795 = vsub.s32 0, %v1794
          %v1796 = vrot.slane %v1791, %v1795
          %v1797 = vlaneseq
          %v1798 = vshrl.u32 %v1797, 7
          %v1799 = vsub.s32 1, %v1798
          %v1800 = vrot.slane %v1791, %v1799
          %v1803 = vmul.f32 %v1765, %v1796
          %v1804 = vmul.f32 %v1766, %v1800
          %v1805 = vmul.f32 %v1767, %v1796
          %v1806 = vmul.f32 %v1768, %v1800
          %v1807 = vmul.f32 %v1769, %v1796
          %v1808 = vmul.f32 %v1770, %v1800
          %v1809 = vmul.f32 %v1771, %v1796
          %v1810 = vmul.f32 %v1772, %v1800
          %v1811 = vmul.f32 %v1773, %v1796
          %v1812 = vmul.f32 %v1774, %v1800
          %v1813 = vmul.f32 %v1775, %v1796
          %v1814 = vmul.f32 %v1776, %v1800
          %v1815 = vmul.f32 %v1777, %v1796
          %v1816 = vmul.f32 %v1778, %v1800
          %v1817 = vmul.f32 %v1779, %v1796
          %v1818 = vmul.f32 %v1780, %v1800
          %v1819 = vmul.f32 %v1781, %v1796
          %v1820 = vmul.f32 %v1782, %v1800
          %v1821 = vmul.f32 %v1783, %v1796
          %v1822 = vmul.f32 %v1784, %v1800
          %v1823 = vmul.f32 %v1785, %v1796
          %v1824 = vmul.f32 %v1786, %v1800
          %v1825 = vmul.f32 %v1787, %v1796
          %v1826 = vmul.f32 %v1788, %v1800
          %v1827 = vmul.f32 %v1789, %v1796
          %v1828 = vmul.f32 %v1790, %v1800
          %v1829 = vld [vmem:[%s653] sm:$0x3]
          %v1831 = vlaneseq
          %v1832 = vshrl.u32 %v1831, 7
          %v1833 = vsub.s32 0, %v1832
          %v1834 = vrot.slane %v1829, %v1833
          %v1835 = vlaneseq
          %v1836 = vshrl.u32 %v1835, 7
          %v1837 = vsub.s32 1, %v1836
          %v1838 = vrot.slane %v1829, %v1837
          %v1841 = vadd.f32 %v1803, %v1834
          %v1842 = vadd.f32 %v1804, %v1838
          %v1843 = vadd.f32 %v1805, %v1834
          %v1844 = vadd.f32 %v1806, %v1838
          %v1845 = vadd.f32 %v1807, %v1834
          %v1846 = vadd.f32 %v1808, %v1838
          %v1847 = vadd.f32 %v1809, %v1834
          %v1848 = vadd.f32 %v1810, %v1838
          %v1849 = vadd.f32 %v1811, %v1834
          %v1850 = vadd.f32 %v1812, %v1838
          %v1851 = vadd.f32 %v1813, %v1834
          %v1852 = vadd.f32 %v1814, %v1838
          %v1853 = vadd.f32 %v1815, %v1834
          %v1854 = vadd.f32 %v1816, %v1838
          %v1855 = vadd.f32 %v1817, %v1834
          %v1856 = vadd.f32 %v1818, %v1838
          %v1857 = vadd.f32 %v1819, %v1834
          %v1858 = vadd.f32 %v1820, %v1838
          %v1859 = vadd.f32 %v1821, %v1834
          %v1860 = vadd.f32 %v1822, %v1838
          %v1861 = vadd.f32 %v1823, %v1834
          %v1862 = vadd.f32 %v1824, %v1838
          %v1863 = vadd.f32 %v1825, %v1834
          %v1864 = vadd.f32 %v1826, %v1838
          %v1865 = vadd.f32 %v1827, %v1834
          %v1866 = vadd.f32 %v1828, %v1838
          %1867 = vst [vmem:[%s630] sm:$0xff] %v1841
          %1868 = vst [vmem:[%s630 + $0x8] sm:$0xff] %v1842
          %1869 = vst [vmem:[%s630 + $0x10] sm:$0xff] %v1843
          %1870 = vst [vmem:[%s630 + $0x18] sm:$0xff] %v1844
          %1871 = vst [vmem:[%s630 + $0x20] sm:$0xff] %v1845
          %1872 = vst [vmem:[%s630 + $0x28] sm:$0xff] %v1846
          %1873 = vst [vmem:[%s630 + $0x30] sm:$0xff] %v1847
          %1874 = vst [vmem:[%s630 + $0x38] sm:$0xff] %v1848
          %1875 = vst [vmem:[%s630 + $0x40] sm:$0xff] %v1849
          %1876 = vst [vmem:[%s630 + $0x48] sm:$0xff] %v1850
          %1877 = vst [vmem:[%s630 + $0x50] sm:$0xff] %v1851
          %1878 = vst [vmem:[%s630 + $0x58] sm:$0xff] %v1852
          %1879 = vst [vmem:[%s630 + $0x60] sm:$0xff] %v1853
          %1880 = vst [vmem:[%s630 + $0x68] sm:$0xff] %v1854
          %1881 = vst [vmem:[%s630 + $0x70] sm:$0xff] %v1855
          %1882 = vst [vmem:[%s630 + $0x78] sm:$0xff] %v1856
          %1883 = vst [vmem:[%s630 + $0x80] sm:$0xff] %v1857
          %1884 = vst [vmem:[%s630 + $0x88] sm:$0xff] %v1858
          %1885 = vst [vmem:[%s630 + $0x90] sm:$0xff] %v1859
          %1886 = vst [vmem:[%s630 + $0x98] sm:$0xff] %v1860
          %1887 = vst [vmem:[%s630 + $0xa0] sm:$0xff] %v1861
          %1888 = vst [vmem:[%s630 + $0xa8] sm:$0xff] %v1862
          %1889 = vst [vmem:[%s630 + $0xb0] sm:$0xff] %v1863
          %1890 = vst [vmem:[%s630 + $0xb8] sm:$0xff] %v1864
          %1891 = vst [vmem:[%s630 + $0xc0] sm:$0xff] %v1865
          %1892 = vst [vmem:[%s630 + $0xc8] sm:$0xff] %v1866
        $region82: #{_pallas_matmul_affine.1} parent=69 // pred_fallthru
          _
        %s1893 = sand.u32 %s155, 1
        %s1894 = scalar_lea.sflag [#allocation5], %s1893
        %s1895 = sand.u32 %s155, 1
        %s1896 = smul.addr %s1895, 208
        %s1897 = scalar_lea.vmem [#allocation4], %s1896
        // Predicated region
        $region83: #{_pallas_matmul_affine.1} parent=69 // pred_check
          %p1898 = pneg %p165
        $region84: #{_pallas_matmul_affine.1} parent=69 // pred_check_branch
          %1900 = sbr.rel (%p1898) target = $region86
        $region85: #{_pallas_matmul_affine.1} parent=69 // pred_region
          %s1901 = smul.u32 13, %s23
          %s1902 = smul.u32 2, %s24
          %s1904 = ssub.s32 3328, 3328
          %1905 = vsyncadd %s1894, %s1904
          %s1906 = smul.addr %s1901, 24
          %s1907 = sadd.s32 %s1902, %s1906
          %s1908 = smul.addr %s1907, 128
          %s1909 = scalar_lea.hbm %s4, %s1908
          %s1910 = sshll.u32 %s1897, 4
          %s1911 = int_to_ptr.vmem [resolvable:$true] %s1910
          %1916 = dma.vmem_to_hbm [thread:$0]  %s1911, 3328, %s1909, %s1894, 256, 3072, 16
        $region86: #{_pallas_matmul_affine.1} parent=69 // pred_fallthru
          _
      $region70: #{_pallas_matmul_affine.1} parent=5 // pred_fallthru
        _
      %p1917 = scmp.le.s32.totalorder 2, %s13
      // Predicated region
      $region87: #{_pallas_matmul_affine.1} parent=5 // pred_check
        %p1918 = pneg %p1917
      $region88: #{_pallas_matmul_affine.1} parent=5 // pred_check_branch
        %1920 = sbr.rel (%p1918) target = $region90
      $region89: #{_pallas_matmul_affine.1} parent=5 // pred_region
        %s1921 = ssub.s32 %s13, 2
        // Predicated region
        $region91: #{_pallas_matmul_affine.1} parent=89 // pred_check
          %p1922 = pneg %p171
        $region92: #{_pallas_matmul_affine.1} parent=89 // pred_check_branch
          %1924 = sbr.rel (%p1922) target = $region94
        $region93: #{_pallas_matmul_affine.1} parent=89 // pred_region
          %s1925 = sand.u32 %s156, 1
          %s1926 = scalar_lea.sflag [#allocation5], %s1925
          %s1927 = sand.u32 %s156, 1
          %s1928 = smul.addr %s1927, 208
          %s1929 = scalar_lea.vmem [#allocation4], %s1928
          %1930 = dma.done %s1926, 3328
        $region94: #{_pallas_matmul_affine.1} parent=89 // pred_fallthru
          _
      $region90: #{_pallas_matmul_affine.1} parent=5 // pred_fallthru
        _
    $region6: #{_pallas_matmul_affine.1} parent=1 // loop_footer
      %s17 = sadd.s32 1, %s13
    $region7: #{_pallas_matmul_affine.1} parent=1 // loop_footer_branch
      %12 = sbr.rel target = $region3
    $region8: #{_pallas_matmul_affine.1} parent=1 // loop_exit
      _
    %1931 = vsyncpa [#allocation5], 1
    %s1932 = scalar_lea.sflag [#allocation5], 1
    %1933 = vsyncpa %s1932, 1

</llo_original>
